<compile_context>
chip_gen: v7x
topology: tpu7x:2x2x1
jax: 0.10.0
libtpu: 0.0.40
codegen_flags: <defaults>
</compile_context>

<pallas_src>
import jax
import jax.numpy as jnp
from jax.experimental import pallas as pl
from jax.experimental.pallas import tpu as pltpu

EPS = 1e-5
NEG_SLOPE = 0.2


def _group_avg_matrix(dim, groups):
    """A[i, j] = 1/group_size if channels i and j share a group, else 0."""
    gsize = dim // groups
    gid = jnp.arange(dim) // gsize
    return (gid[:, None] == gid[None, :]).astype(jnp.float32) / float(gsize)


def _block_diag3(w):
    """block_diag(w, w, w) — same channel-mixing weight for all 3 components."""
    return jnp.kron(jnp.eye(3, dtype=jnp.float32), w)


def _pack_bias_slab(segments):
    """Concatenate 1-D segments, padding each to a multiple of 8 sublanes."""
    padded, offsets, off = [], [], 0
    for s in segments:
        offsets.append(off)
        pad = (-s.shape[0]) % 8
        if pad:
            s = jnp.concatenate([s, jnp.zeros((pad,), s.dtype)])
        padded.append(s)
        off += s.shape[0]
    return jnp.concatenate(padded).reshape(-1, 1), tuple(offsets)


def _choose_tn(n, tn):
    """Node-tile size: multiple of 128 dividing N, with >= 2 grid steps when possible."""
    tn = min(tn, n)
    if n % 128:
        return n                       # small / ragged N: one full block
    half = (n // 2) // 128 * 128
    if half >= 128:
        tn = min(tn, half)             # keep >= 2 steps for megacore / v7x 2 TCs
    tn = max(128, (tn // 128) * 128)
    while n % tn:
        tn -= 128
    return tn


def _pick_vmem_limit():
    try:
        cap = pltpu.get_tpu_info().vmem_capacity_bytes
    except Exception:
        cap = 64 * 1024 * 1024
    # ~3/4 of physical VMEM, capped: ~96 MiB on v5e/v6e (128 MiB), ~48 MiB on v7x (64 MiB)
    return int(min(cap * 3 // 4, 96 * 1024 * 1024))


def make_kernel(adim, vdim, rank, offs):
    f32 = jnp.float32
    V, R = 3 * vdim, 3 * rank
    o_b1a, o_ba2, o_b3a, o_ga, o_bta, o_gv = offs

    def dot(w, x):
        # DEFAULT matmul precision (single bf16 MXU pass), f32 accumulation.
        return jnp.dot(w, x, preferred_element_type=f32)

    def leaky(x):
        return jnp.maximum(x, NEG_SLOPE * x)

    def kernel(x_a_ref, x_v_ref, w1a_ref, wa2_ref, wa3_ref, wao_ref,
               wv1_ref, wv2_ref, wv3_ref, wvo_ref, aa_ref, av_ref, bias_ref,
               out_a_ref, out_v_ref):
        # bf16 in HBM; all in-kernel math in f32 (v5e VPU has no bf16 ALU).
        x_a = x_a_ref[...].astype(f32)          # (adim, TN)    lanes = nodes
        x_v = x_v_ref[...].astype(f32)          # (3*vdim, TN)  component-stacked

        b = bias_ref[...]                       # (P, 1) padded slab
        b1a = b[o_b1a:o_b1a + adim + rank]
        ba2 = b[o_ba2:o_ba2 + adim]
        b3a = b[o_b3a:o_b3a + adim]
        ga = b[o_ga:o_ga + adim]
        bta = b[o_bta:o_bta + adim]
        gv = b[o_gv:o_gv + vdim]

        # ----- scalar MLP layer 1 fused with the ScalVecProducts a_l projection
        h_cat = dot(w1a_ref[...], x_a) + b1a            # (adim+rank, TN)
        h1 = leaky(h_cat[:adim])
        a_l = h_cat[adim:adim + rank]                   # (rank, TN)
        h2 = leaky(dot(wa2_ref[...], h1) + ba2)         # (adim, TN)

        # ----- vector stream layer 1: ONE block-diagonal matmul for all three
        #       spatial components + the v_l / v_r low-rank projections
        r1 = dot(wv1_ref[...], x_v)                     # (3*vdim + 6*rank, TN)
        h_v = r1[:V]
        v_l = r1[V:V + R]
        v_r = r1[V + R:V + 2 * R]

        def vsig(h):                                    # gate by sigmoid(|v|)
            n2 = (h[:vdim] * h[:vdim]
                  + h[vdim:2 * vdim] * h[vdim:2 * vdim]
                  + h[2 * vdim:] * h[2 * vdim:])
            gate = jax.nn.sigmoid(jnp.sqrt(n2))         # (vdim, TN)
            return jnp.concatenate([h[:vdim] * gate,
                                    h[vdim:2 * vdim] * gate,
                                    h[2 * vdim:] * gate], axis=0)

        g1 = vsig(h_v)                                  # (3*vdim, TN)
        g2 = vsig(dot(wv2_ref[...], g1))                # (3*vdim, TN)

        # ----- scalar<->vector low-rank products
        dot_lr = (v_l[:rank] * v_r[:rank]
                  + v_l[rank:2 * rank] * v_r[rank:2 * rank]
                  + v_l[2 * rank:] * v_r[2 * rank:])    # (rank, TN)
        avr = jnp.concatenate([a_l * v_r[:rank],
                               a_l * v_r[rank:2 * rank],
                               a_l * v_r[2 * rank:]], axis=0)   # (3*rank, TN)

        # ----- output layers: two matmuls each, no per-tile concatenate copies
        s = dot(wa3_ref[...], h2) + dot(wao_ref[...], dot_lr) + b3a   # (adim, TN)
        t = dot(wv3_ref[...], g2) + dot(wvo_ref[...], avr)            # (3*vdim, TN)

        # ----- ScalGroupNorm: centered stats (no E[x^2]-E[x]^2 cancellation)
        aa = aa_ref[...]
        mean_c = dot(aa, s)
        d = s - mean_c
        var_c = dot(aa, d * d)
        z_a = d * jax.lax.rsqrt(var_c + EPS) * ga + bta

        # ----- VecGroupNorm: RMS of vector norms per channel group
        n2t = (t[:vdim] * t[:vdim]
               + t[vdim:2 * vdim] * t[vdim:2 * vdim]
               + t[2 * vdim:] * t[2 * vdim:])                          # (vdim, TN)
        scale = jax.lax.rsqrt(dot(av_ref[...], n2t) + EPS) * gv        # (vdim, TN)

        # ----- residual; stores are lane-dense over the node tile
        out_a_ref[...] = (x_a + z_a).astype(out_a_ref.dtype)
        for c in range(3):
            lo, hi = c * vdim, (c + 1) * vdim
            out_v_ref[lo:hi, :] = (x_v[lo:hi] + t[lo:hi] * scale).astype(out_v_ref.dtype)

    return kernel


def local_residual_pallas_lanemajor(x_a_lm, x_v_lm, params, config, tn=1024,
                                    vmem_limit_bytes=None):
    """Core entry point.

    x_a_lm: (adim, N); x_v_lm: (3*vdim, N) with rows = [comp0 chans, comp1, comp2].
    Activations are streamed through HBM as bf16; outputs have the same layout/dtype.
    """
    adim, vdim, rank = config["adim"], config["vdim"], config["rank"]
    agroups, vgroups = config["agroups"], config["vgroups"]
    N = x_a_lm.shape[1]
    tn = _choose_tn(N, tn)
    assert N % tn == 0 and (tn % 128 == 0 or tn == N)

    act_dt = jnp.bfloat16
    x_a_lm = x_a_lm.astype(act_dt)
    x_v_lm = x_v_lm.astype(act_dt)

    p = {k: jnp.asarray(v, jnp.float32) for k, v in params.items()}
    # Shared-input weight fusions (PyTorch (out, in) convention; matmuls are W @ x).
    w1a = jnp.concatenate([p["wa1"], p["wal"]], axis=0)               # (adim+rank, adim)
    wv1_big = jnp.concatenate([_block_diag3(p["wv1"]),
                               _block_diag3(p["wvl"]),
                               _block_diag3(p["wvr"])], axis=0)       # (3v+6r, 3v)
    wv2_blk = _block_diag3(p["wv2"])                                  # (3v, 3v)
    wv3_blk = _block_diag3(p["wv3"])                                  # (3v, 3v)
    wvo_blk = _block_diag3(p["wvo"])                                  # (3v, 3r)
    aa = _group_avg_matrix(adim, agroups)
    av = _group_avg_matrix(vdim, vgroups)
    bias, offs = _pack_bias_slab([
        jnp.concatenate([p["ba1"], p["bal"]]), p["ba2"], p["ba3"] + p["bao"],
        p["ga"], p["bta"], p["gv"]])

    consts = [w1a, p["wa2"], p["wa3"], p["wao"],
              wv1_big, wv2_blk, wv3_blk, wvo_blk, aa, av, bias]

    def const_spec(arr):
        zeros = (0,) * arr.ndim
        return pl.BlockSpec(arr.shape, lambda i, _z=zeros: _z)

    in_specs = [
        pl.BlockSpec((adim, tn), lambda i: (0, i)),
        pl.BlockSpec((3 * vdim, tn), lambda i: (0, i)),
    ] + [const_spec(c) for c in consts]

    out_specs = (
        pl.BlockSpec((adim, tn), lambda i: (0, i)),
        pl.BlockSpec((3 * vdim, tn), lambda i: (0, i)),
    )
    out_shape = (
        jax.ShapeDtypeStruct((adim, N), act_dt),
        jax.ShapeDtypeStruct((3 * vdim, N), act_dt),
    )

    if vmem_limit_bytes is None:
        vmem_limit_bytes = _pick_vmem_limit()

    kernel = make_kernel(adim, vdim, rank, offs)
    return pl.pallas_call(
        kernel,
        grid=(N // tn,),
        in_specs=in_specs,
        out_specs=out_specs,
        out_shape=out_shape,
        compiler_params=pltpu.CompilerParams(
            dimension_semantics=("parallel",),
            vmem_limit_bytes=vmem_limit_bytes,
        ),
    )(x_a_lm, x_v_lm, *consts)


def local_residual_pallas(x_a, x_v, params, config, tn=1024):
    """PyTorch-layout convenience wrapper: x_a (N, adim), x_v (N, vdim, 3).

    NOTE: when stacking many LocalResidual layers, keep the lane-major
    (adim, N) / (3*vdim, N) bf16 layout persistent across layers and call
    local_residual_pallas_lanemajor directly — the HBM transposes below are
    only needed at the network boundary.
    """
    adim, vdim = config["adim"], config["vdim"]
    N = x_a.shape[0]
    x_a_lm = jnp.transpose(x_a, (1, 0))
    x_v_lm = jnp.transpose(x_v, (2, 1, 0)).reshape(3 * vdim, N)
    out_a_lm, out_v_lm = local_residual_pallas_lanemajor(
        x_a_lm, x_v_lm, params, config, tn=tn)
    out_a = jnp.transpose(out_a_lm.astype(jnp.float32), (1, 0))
    out_v = jnp.transpose(out_v_lm.astype(jnp.float32).reshape(3, vdim, N), (2, 1, 0))
    return out_a, out_v


# -------------------- pure-JAX reference (PyTorch layout) --------------------
def reference(x_a, x_v, p, config):
    adim, vdim = config["adim"], config["vdim"]
    ag, vg = config["agroups"], config["vgroups"]
    lin = lambda x, w, b: x @ w.T + b
    leaky = lambda x: jnp.where(x >= 0, x, NEG_SLOPE * x)
    veclin = lambda v, w: jnp.einsum("nic,oi->noc", v, w)

    def vsig(v):
        n = jnp.sqrt(jnp.sum(v * v, axis=-1, keepdims=True))
        return v * jax.nn.sigmoid(n)

    y_a = lin(leaky(lin(leaky(lin(x_a, p["wa1"], p["ba1"])), p["wa2"], p["ba2"])),
              p["wa3"], p["ba3"])
    y_v = veclin(vsig(veclin(vsig(veclin(x_v, p["wv1"])), p["wv2"])), p["wv3"])

    a_l = lin(x_a, p["wal"], p["bal"])
    v_l = veclin(x_v, p["wvl"])
    v_r = veclin(x_v, p["wvr"])
    p_a = lin(jnp.sum(v_l * v_r, -1), p["wao"], p["bao"])
    p_v = veclin(a_l[..., None] * v_r, p["wvo"])

    s = y_a + p_a
    N = s.shape[0]
    sg = s.reshape(N, ag, adim // ag)
    mu = sg.mean(-1, keepdims=True)
    var = ((sg - mu) ** 2).mean(-1, keepdims=True)
    z_a = ((sg - mu) / jnp.sqrt(var + EPS)).reshape(N, adim) * p["ga"] + p["bta"]

    t = y_v + p_v
    n2 = jnp.sum(t * t, -1)
    ms = n2.reshape(N, vg, vdim // vg).mean(-1, keepdims=True)
    scale = jnp.broadcast_to(1.0 / jnp.sqrt(ms + EPS), (N, vg, vdim // vg)).reshape(N, vdim)
    z_v = t * (scale * p["gv"])[..., None]
    return x_a + z_a, x_v + z_v


def init_params(key, adim, vdim, rank):
    ks = jax.random.split(key, 19)
    n = lambda k, shp, s=0.2: s * jax.random.normal(k, shp, dtype=jnp.float32)
    return {
        "wa1": n(ks[0], (adim, adim)), "ba1": n(ks[1], (adim,)),
        "wa2": n(ks[2], (adim, adim)), "ba2": n(ks[3], (adim,)),
        "wa3": n(ks[4], (adim, adim)), "ba3": n(ks[5], (adim,)),
        "wv1": n(ks[6], (vdim, vdim)), "wv2": n(ks[7], (vdim, vdim)),
        "wv3": n(ks[8], (vdim, vdim)),
        "wal": n(ks[9], (rank, adim)), "bal": n(ks[10], (rank,)),
        "wvl": n(ks[11], (rank, vdim)), "wvr": n(ks[12], (rank, vdim)),
        "wao": n(ks[13], (adim, rank)), "bao": n(ks[14], (adim,)),
        "wvo": n(ks[15], (vdim, rank)),
        "ga": 1.0 + n(ks[16], (adim,), 0.05), "bta": n(ks[17], (adim,), 0.05),
        "gv": 1.0 + n(ks[18], (vdim,), 0.05),
    }


if __name__ == "__main__":
    config = dict(adim=32, vdim=16, rank=8, agroups=4, vgroups=4)
    N = 512                   # two 256-node lane-dense tiles -> 2 grid steps
    key = jax.random.PRNGKey(0)
    k1, k2, k3 = jax.random.split(key, 3)
    x_a = jax.random.normal(k1, (N, config["adim"]), dtype=jnp.float32)
    x_v = jax.random.normal(k2, (N, config["vdim"], 3), dtype=jnp.float32)
    params = init_params(k3, config["adim"], config["vdim"], config["rank"])

    out_a, out_v = local_residual_pallas(x_a, x_v, params, config, tn=256)
    out_a = jax.block_until_ready(out_a)
    out_v = jax.block_until_ready(out_v)

    # The kernel streams activations as bf16 in HBM, so compare against the
    # full-precision reference evaluated on the bf16-rounded inputs; the
    # remaining difference is the default (single-pass bf16) MXU precision
    # inside the kernel plus bf16 output rounding.
    q = lambda z: z.astype(jnp.bfloat16).astype(jnp.float32)
    with jax.default_matmul_precision("highest"):
        ref_a, ref_v = reference(q(x_a), q(x_v), params, config)
    ref_a = jax.block_until_ready(ref_a)
    ref_v = jax.block_until_ready(ref_v)

    assert jnp.allclose(out_a, ref_a, atol=5e-2, rtol=5e-2), \
        float(jnp.max(jnp.abs(out_a - ref_a)))
    assert jnp.allclose(out_v, ref_v, atol=5e-2, rtol=5e-2), \
        float(jnp.max(jnp.abs(out_v - ref_v)))
    print("KERNEL_OK")
</pallas_src>

<mosaic_0001>
module attributes {stable_mosaic.version = 11 : i64} {
  func.func @kernel(%arg0: i32, %arg1: memref<32x256xbf16, #tpu.memory_space<vmem>>, %arg2: memref<48x256xbf16, #tpu.memory_space<vmem>>, %arg3: memref<40x32xf32, #tpu.memory_space<vmem>>, %arg4: memref<32x32xf32, #tpu.memory_space<vmem>>, %arg5: memref<32x32xf32, #tpu.memory_space<vmem>>, %arg6: memref<32x8xf32, #tpu.memory_space<vmem>>, %arg7: memref<96x48xf32, #tpu.memory_space<vmem>>, %arg8: memref<48x48xf32, #tpu.memory_space<vmem>>, %arg9: memref<48x48xf32, #tpu.memory_space<vmem>>, %arg10: memref<48x24xf32, #tpu.memory_space<vmem>>, %arg11: memref<32x32xf32, #tpu.memory_space<vmem>>, %arg12: memref<16x16xf32, #tpu.memory_space<vmem>>, %arg13: memref<184x1xf32, #tpu.memory_space<vmem>>, %arg14: memref<32x256xbf16, #tpu.memory_space<vmem>>, %arg15: memref<48x256xbf16, #tpu.memory_space<vmem>>) attributes {dimension_semantics = [#tpu.dimension_semantics<parallel>], iteration_bounds = array<i64: 2>, scalar_prefetch = 0 : i64, scratch_operands = 0 : i64, tpu.core_type = #tpu.core_type<tc>, window_params = [{transform_indices = @transform_0, window_bounds = array<i64: 32, 256>}, {transform_indices = @transform_1, window_bounds = array<i64: 48, 256>}, {pipeline_mode = #tpu.pipeline_mode<synchronous>, transform_indices = @transform_2, window_bounds = array<i64: 40, 32>}, {pipeline_mode = #tpu.pipeline_mode<synchronous>, transform_indices = @transform_3, window_bounds = array<i64: 32, 32>}, {pipeline_mode = #tpu.pipeline_mode<synchronous>, transform_indices = @transform_4, window_bounds = array<i64: 32, 32>}, {pipeline_mode = #tpu.pipeline_mode<synchronous>, transform_indices = @transform_5, window_bounds = array<i64: 32, 8>}, {pipeline_mode = #tpu.pipeline_mode<synchronous>, transform_indices = @transform_6, window_bounds = array<i64: 96, 48>}, {pipeline_mode = #tpu.pipeline_mode<synchronous>, transform_indices = @transform_7, window_bounds = array<i64: 48, 48>}, {pipeline_mode = #tpu.pipeline_mode<synchronous>, transform_indices = @transform_8, window_bounds = array<i64: 48, 48>}, {pipeline_mode = #tpu.pipeline_mode<synchronous>, transform_indices = @transform_9, window_bounds = array<i64: 48, 24>}, {pipeline_mode = #tpu.pipeline_mode<synchronous>, transform_indices = @transform_10, window_bounds = array<i64: 32, 32>}, {pipeline_mode = #tpu.pipeline_mode<synchronous>, transform_indices = @transform_11, window_bounds = array<i64: 16, 16>}, {pipeline_mode = #tpu.pipeline_mode<synchronous>, transform_indices = @transform_12, window_bounds = array<i64: 184, 1>}, {transform_indices = @transform_13, window_bounds = array<i64: 32, 256>}, {transform_indices = @transform_14, window_bounds = array<i64: 48, 256>}]} {
    %c0 = arith.constant 0 : index
    %c0_0 = arith.constant 0 : index
    %0 = vector.load %arg1[%c0, %c0_0] : memref<32x256xbf16, #tpu.memory_space<vmem>>, vector<32x256xbf16>
    %1 = arith.extf %0 : vector<32x256xbf16> to vector<32x256xf32>
    %c0_1 = arith.constant 0 : index
    %c0_2 = arith.constant 0 : index
    %2 = vector.load %arg2[%c0_1, %c0_2] : memref<48x256xbf16, #tpu.memory_space<vmem>>, vector<48x256xbf16>
    %3 = arith.extf %2 : vector<48x256xbf16> to vector<48x256xf32>
    %c0_3 = arith.constant 0 : index
    %c0_4 = arith.constant 0 : index
    %4 = vector.load %arg13[%c0_3, %c0_4] : memref<184x1xf32, #tpu.memory_space<vmem>>, vector<184x1xf32>
    %5 = vector.extract_strided_slice %4 {offsets = [0, 0], sizes = [40, 1], strides = [1, 1]} : vector<184x1xf32> to vector<40x1xf32>
    %6 = vector.extract_strided_slice %4 {offsets = [40, 0], sizes = [32, 1], strides = [1, 1]} : vector<184x1xf32> to vector<32x1xf32>
    %7 = vector.extract_strided_slice %4 {offsets = [72, 0], sizes = [32, 1], strides = [1, 1]} : vector<184x1xf32> to vector<32x1xf32>
    %8 = vector.extract_strided_slice %4 {offsets = [104, 0], sizes = [32, 1], strides = [1, 1]} : vector<184x1xf32> to vector<32x1xf32>
    %9 = vector.extract_strided_slice %4 {offsets = [136, 0], sizes = [32, 1], strides = [1, 1]} : vector<184x1xf32> to vector<32x1xf32>
    %10 = vector.extract_strided_slice %4 {offsets = [168, 0], sizes = [16, 1], strides = [1, 1]} : vector<184x1xf32> to vector<16x1xf32>
    %c0_5 = arith.constant 0 : index
    %c0_6 = arith.constant 0 : index
    %11 = vector.load %arg3[%c0_5, %c0_6] : memref<40x32xf32, #tpu.memory_space<vmem>>, vector<40x32xf32>
    %cst = arith.constant dense<0.000000e+00> : vector<40x256xf32>
    %12 = tpu.matmul %11, %1, %cst {dimension_numbers = #tpu.dot_dimension_numbers<[1], [0], [0], [1], [0, 0, 1, 1], [], []>} : vector<40x32xf32>, vector<32x256xf32>, vector<40x256xf32> -> vector<40x256xf32>
    %13 = vector.broadcast %5 : vector<40x1xf32> to vector<40x256xf32>
    %14 = arith.addf %12, %13 : vector<40x256xf32>
    %15 = vector.extract_strided_slice %14 {offsets = [0, 0], sizes = [32, 256], strides = [1, 1]} : vector<40x256xf32> to vector<32x256xf32>
    %cst_7 = arith.constant 2.000000e-01 : f32
    %16 = vector.broadcast %cst_7 : f32 to vector<32x256xf32>
    %17 = arith.mulf %16, %15 : vector<32x256xf32>
    %18 = arith.maximumf %15, %17 : vector<32x256xf32>
    %19 = vector.extract_strided_slice %14 {offsets = [32, 0], sizes = [8, 256], strides = [1, 1]} : vector<40x256xf32> to vector<8x256xf32>
    %c0_8 = arith.constant 0 : index
    %c0_9 = arith.constant 0 : index
    %20 = vector.load %arg4[%c0_8, %c0_9] : memref<32x32xf32, #tpu.memory_space<vmem>>, vector<32x32xf32>
    %cst_10 = arith.constant dense<0.000000e+00> : vector<32x256xf32>
    %21 = tpu.matmul %20, %18, %cst_10 {dimension_numbers = #tpu.dot_dimension_numbers<[1], [0], [0], [1], [0, 0, 1, 1], [], []>} : vector<32x32xf32>, vector<32x256xf32>, vector<32x256xf32> -> vector<32x256xf32>
    %22 = vector.broadcast %6 : vector<32x1xf32> to vector<32x256xf32>
    %23 = arith.addf %21, %22 : vector<32x256xf32>
    %cst_11 = arith.constant 2.000000e-01 : f32
    %24 = vector.broadcast %cst_11 : f32 to vector<32x256xf32>
    %25 = arith.mulf %24, %23 : vector<32x256xf32>
    %26 = arith.maximumf %23, %25 : vector<32x256xf32>
    %c0_12 = arith.constant 0 : index
    %c0_13 = arith.constant 0 : index
    %27 = vector.load %arg7[%c0_12, %c0_13] : memref<96x48xf32, #tpu.memory_space<vmem>>, vector<96x48xf32>
    %cst_14 = arith.constant dense<0.000000e+00> : vector<96x256xf32>
    %28 = tpu.matmul %27, %3, %cst_14 {dimension_numbers = #tpu.dot_dimension_numbers<[1], [0], [0], [1], [0, 0, 1, 1], [], []>} : vector<96x48xf32>, vector<48x256xf32>, vector<96x256xf32> -> vector<96x256xf32>
    %29 = vector.extract_strided_slice %28 {offsets = [0, 0], sizes = [48, 256], strides = [1, 1]} : vector<96x256xf32> to vector<48x256xf32>
    %30 = vector.extract_strided_slice %28 {offsets = [48, 0], sizes = [24, 256], strides = [1, 1]} : vector<96x256xf32> to vector<24x256xf32>
    %31 = vector.extract_strided_slice %28 {offsets = [72, 0], sizes = [24, 256], strides = [1, 1]} : vector<96x256xf32> to vector<24x256xf32>
    %32 = vector.extract_strided_slice %29 {offsets = [0, 0], sizes = [16, 256], strides = [1, 1]} : vector<48x256xf32> to vector<16x256xf32>
    %33 = vector.extract_strided_slice %29 {offsets = [0, 0], sizes = [16, 256], strides = [1, 1]} : vector<48x256xf32> to vector<16x256xf32>
    %34 = arith.mulf %32, %33 : vector<16x256xf32>
    %35 = vector.extract_strided_slice %29 {offsets = [16, 0], sizes = [16, 256], strides = [1, 1]} : vector<48x256xf32> to vector<16x256xf32>
    %36 = vector.extract_strided_slice %29 {offsets = [16, 0], sizes = [16, 256], strides = [1, 1]} : vector<48x256xf32> to vector<16x256xf32>
    %37 = arith.mulf %35, %36 : vector<16x256xf32>
    %38 = arith.addf %34, %37 : vector<16x256xf32>
    %39 = vector.extract_strided_slice %29 {offsets = [32, 0], sizes = [16, 256], strides = [1, 1]} : vector<48x256xf32> to vector<16x256xf32>
    %40 = vector.extract_strided_slice %29 {offsets = [32, 0], sizes = [16, 256], strides = [1, 1]} : vector<48x256xf32> to vector<16x256xf32>
    %41 = arith.mulf %39, %40 : vector<16x256xf32>
    %42 = arith.addf %38, %41 : vector<16x256xf32>
    %43 = math.sqrt %42 : vector<16x256xf32>
    %44 = arith.negf %43 : vector<16x256xf32>
    %45 = math.exp %44 : vector<16x256xf32>
    %cst_15 = arith.constant 1.000000e+00 : f32
    %46 = vector.broadcast %cst_15 : f32 to vector<16x256xf32>
    %47 = arith.addf %46, %45 : vector<16x256xf32>
    %48 = arith.divf %46, %47 : vector<16x256xf32>
    %49 = vector.extract_strided_slice %29 {offsets = [0, 0], sizes = [16, 256], strides = [1, 1]} : vector<48x256xf32> to vector<16x256xf32>
    %50 = arith.mulf %49, %48 : vector<16x256xf32>
    %51 = vector.extract_strided_slice %29 {offsets = [16, 0], sizes = [16, 256], strides = [1, 1]} : vector<48x256xf32> to vector<16x256xf32>
    %52 = arith.mulf %51, %48 : vector<16x256xf32>
    %53 = vector.extract_strided_slice %29 {offsets = [32, 0], sizes = [16, 256], strides = [1, 1]} : vector<48x256xf32> to vector<16x256xf32>
    %54 = arith.mulf %53, %48 : vector<16x256xf32>
    %55 = tpu.concatenate %50, %52, %54 in 0 : vector<16x256xf32>, vector<16x256xf32>, vector<16x256xf32> -> vector<48x256xf32>
    %c0_16 = arith.constant 0 : index
    %c0_17 = arith.constant 0 : index
    %56 = vector.load %arg8[%c0_16, %c0_17] : memref<48x48xf32, #tpu.memory_space<vmem>>, vector<48x48xf32>
    %cst_18 = arith.constant dense<0.000000e+00> : vector<48x256xf32>
    %57 = tpu.matmul %56, %55, %cst_18 {dimension_numbers = #tpu.dot_dimension_numbers<[1], [0], [0], [1], [0, 0, 1, 1], [], []>} : vector<48x48xf32>, vector<48x256xf32>, vector<48x256xf32> -> vector<48x256xf32>
    %58 = vector.extract_strided_slice %57 {offsets = [0, 0], sizes = [16, 256], strides = [1, 1]} : vector<48x256xf32> to vector<16x256xf32>
    %59 = vector.extract_strided_slice %57 {offsets = [0, 0], sizes = [16, 256], strides = [1, 1]} : vector<48x256xf32> to vector<16x256xf32>
    %60 = arith.mulf %58, %59 : vector<16x256xf32>
    %61 = vector.extract_strided_slice %57 {offsets = [16, 0], sizes = [16, 256], strides = [1, 1]} : vector<48x256xf32> to vector<16x256xf32>
    %62 = vector.extract_strided_slice %57 {offsets = [16, 0], sizes = [16, 256], strides = [1, 1]} : vector<48x256xf32> to vector<16x256xf32>
    %63 = arith.mulf %61, %62 : vector<16x256xf32>
    %64 = arith.addf %60, %63 : vector<16x256xf32>
    %65 = vector.extract_strided_slice %57 {offsets = [32, 0], sizes = [16, 256], strides = [1, 1]} : vector<48x256xf32> to vector<16x256xf32>
    %66 = vector.extract_strided_slice %57 {offsets = [32, 0], sizes = [16, 256], strides = [1, 1]} : vector<48x256xf32> to vector<16x256xf32>
    %67 = arith.mulf %65, %66 : vector<16x256xf32>
    %68 = arith.addf %64, %67 : vector<16x256xf32>
    %69 = math.sqrt %68 : vector<16x256xf32>
    %70 = arith.negf %69 : vector<16x256xf32>
    %71 = math.exp %70 : vector<16x256xf32>
    %cst_19 = arith.constant 1.000000e+00 : f32
    %72 = vector.broadcast %cst_19 : f32 to vector<16x256xf32>
    %73 = arith.addf %72, %71 : vector<16x256xf32>
    %74 = arith.divf %72, %73 : vector<16x256xf32>
    %75 = vector.extract_strided_slice %57 {offsets = [0, 0], sizes = [16, 256], strides = [1, 1]} : vector<48x256xf32> to vector<16x256xf32>
    %76 = arith.mulf %75, %74 : vector<16x256xf32>
    %77 = vector.extract_strided_slice %57 {offsets = [16, 0], sizes = [16, 256], strides = [1, 1]} : vector<48x256xf32> to vector<16x256xf32>
    %78 = arith.mulf %77, %74 : vector<16x256xf32>
    %79 = vector.extract_strided_slice %57 {offsets = [32, 0], sizes = [16, 256], strides = [1, 1]} : vector<48x256xf32> to vector<16x256xf32>
    %80 = arith.mulf %79, %74 : vector<16x256xf32>
    %81 = tpu.concatenate %76, %78, %80 in 0 : vector<16x256xf32>, vector<16x256xf32>, vector<16x256xf32> -> vector<48x256xf32>
    %82 = vector.extract_strided_slice %30 {offsets = [0, 0], sizes = [8, 256], strides = [1, 1]} : vector<24x256xf32> to vector<8x256xf32>
    %83 = vector.extract_strided_slice %31 {offsets = [0, 0], sizes = [8, 256], strides = [1, 1]} : vector<24x256xf32> to vector<8x256xf32>
    %84 = arith.mulf %82, %83 : vector<8x256xf32>
    %85 = vector.extract_strided_slice %30 {offsets = [8, 0], sizes = [8, 256], strides = [1, 1]} : vector<24x256xf32> to vector<8x256xf32>
    %86 = vector.extract_strided_slice %31 {offsets = [8, 0], sizes = [8, 256], strides = [1, 1]} : vector<24x256xf32> to vector<8x256xf32>
    %87 = arith.mulf %85, %86 : vector<8x256xf32>
    %88 = arith.addf %84, %87 : vector<8x256xf32>
    %89 = vector.extract_strided_slice %30 {offsets = [16, 0], sizes = [8, 256], strides = [1, 1]} : vector<24x256xf32> to vector<8x256xf32>
    %90 = vector.extract_strided_slice %31 {offsets = [16, 0], sizes = [8, 256], strides = [1, 1]} : vector<24x256xf32> to vector<8x256xf32>
    %91 = arith.mulf %89, %90 : vector<8x256xf32>
    %92 = arith.addf %88, %91 : vector<8x256xf32>
    %93 = vector.extract_strided_slice %31 {offsets = [0, 0], sizes = [8, 256], strides = [1, 1]} : vector<24x256xf32> to vector<8x256xf32>
    %94 = arith.mulf %19, %93 : vector<8x256xf32>
    %95 = vector.extract_strided_slice %31 {offsets = [8, 0], sizes = [8, 256], strides = [1, 1]} : vector<24x256xf32> to vector<8x256xf32>
    %96 = arith.mulf %19, %95 : vector<8x256xf32>
    %97 = vector.extract_strided_slice %31 {offsets = [16, 0], sizes = [8, 256], strides = [1, 1]} : vector<24x256xf32> to vector<8x256xf32>
    %98 = arith.mulf %19, %97 : vector<8x256xf32>
    %99 = tpu.concatenate %94, %96, %98 in 0 : vector<8x256xf32>, vector<8x256xf32>, vector<8x256xf32> -> vector<24x256xf32>
    %c0_20 = arith.constant 0 : index
    %c0_21 = arith.constant 0 : index
    %100 = vector.load %arg5[%c0_20, %c0_21] : memref<32x32xf32, #tpu.memory_space<vmem>>, vector<32x32xf32>
    %cst_22 = arith.constant dense<0.000000e+00> : vector<32x256xf32>
    %101 = tpu.matmul %100, %26, %cst_22 {dimension_numbers = #tpu.dot_dimension_numbers<[1], [0], [0], [1], [0, 0, 1, 1], [], []>} : vector<32x32xf32>, vector<32x256xf32>, vector<32x256xf32> -> vector<32x256xf32>
    %c0_23 = arith.constant 0 : index
    %c0_24 = arith.constant 0 : index
    %102 = vector.load %arg6[%c0_23, %c0_24] : memref<32x8xf32, #tpu.memory_space<vmem>>, vector<32x8xf32>
    %cst_25 = arith.constant dense<0.000000e+00> : vector<32x256xf32>
    %103 = tpu.matmul %102, %92, %cst_25 {dimension_numbers = #tpu.dot_dimension_numbers<[1], [0], [0], [1], [0, 0, 1, 1], [], []>} : vector<32x8xf32>, vector<8x256xf32>, vector<32x256xf32> -> vector<32x256xf32>
    %104 = arith.addf %101, %103 : vector<32x256xf32>
    %105 = vector.broadcast %7 : vector<32x1xf32> to vector<32x256xf32>
    %106 = arith.addf %104, %105 : vector<32x256xf32>
    %c0_26 = arith.constant 0 : index
    %c0_27 = arith.constant 0 : index
    %107 = vector.load %arg9[%c0_26, %c0_27] : memref<48x48xf32, #tpu.memory_space<vmem>>, vector<48x48xf32>
    %cst_28 = arith.constant dense<0.000000e+00> : vector<48x256xf32>
    %108 = tpu.matmul %107, %81, %cst_28 {dimension_numbers = #tpu.dot_dimension_numbers<[1], [0], [0], [1], [0, 0, 1, 1], [], []>} : vector<48x48xf32>, vector<48x256xf32>, vector<48x256xf32> -> vector<48x256xf32>
    %c0_29 = arith.constant 0 : index
    %c0_30 = arith.constant 0 : index
    %109 = vector.load %arg10[%c0_29, %c0_30] : memref<48x24xf32, #tpu.memory_space<vmem>>, vector<48x24xf32>
    %cst_31 = arith.constant dense<0.000000e+00> : vector<48x256xf32>
    %110 = tpu.matmul %109, %99, %cst_31 {dimension_numbers = #tpu.dot_dimension_numbers<[1], [0], [0], [1], [0, 0, 1, 1], [], []>} : vector<48x24xf32>, vector<24x256xf32>, vector<48x256xf32> -> vector<48x256xf32>
    %111 = arith.addf %108, %110 : vector<48x256xf32>
    %c0_32 = arith.constant 0 : index
    %c0_33 = arith.constant 0 : index
    %112 = vector.load %arg11[%c0_32, %c0_33] : memref<32x32xf32, #tpu.memory_space<vmem>>, vector<32x32xf32>
    %cst_34 = arith.constant dense<0.000000e+00> : vector<32x256xf32>
    %113 = tpu.matmul %112, %106, %cst_34 {dimension_numbers = #tpu.dot_dimension_numbers<[1], [0], [0], [1], [0, 0, 1, 1], [], []>} : vector<32x32xf32>, vector<32x256xf32>, vector<32x256xf32> -> vector<32x256xf32>
    %114 = arith.subf %106, %113 : vector<32x256xf32>
    %115 = arith.mulf %114, %114 : vector<32x256xf32>
    %cst_35 = arith.constant dense<0.000000e+00> : vector<32x256xf32>
    %116 = tpu.matmul %112, %115, %cst_35 {dimension_numbers = #tpu.dot_dimension_numbers<[1], [0], [0], [1], [0, 0, 1, 1], [], []>} : vector<32x32xf32>, vector<32x256xf32>, vector<32x256xf32> -> vector<32x256xf32>
    %cst_36 = arith.constant 9.99999974E-6 : f32
    %117 = vector.broadcast %cst_36 : f32 to vector<32x256xf32>
    %118 = arith.addf %116, %117 : vector<32x256xf32>
    %119 = math.rsqrt %118 : vector<32x256xf32>
    %120 = arith.mulf %114, %119 : vector<32x256xf32>
    %121 = vector.broadcast %8 : vector<32x1xf32> to vector<32x256xf32>
    %122 = arith.mulf %120, %121 : vector<32x256xf32>
    %123 = vector.broadcast %9 : vector<32x1xf32> to vector<32x256xf32>
    %124 = arith.addf %122, %123 : vector<32x256xf32>
    %125 = vector.extract_strided_slice %111 {offsets = [0, 0], sizes = [16, 256], strides = [1, 1]} : vector<48x256xf32> to vector<16x256xf32>
    %126 = vector.extract_strided_slice %111 {offsets = [0, 0], sizes = [16, 256], strides = [1, 1]} : vector<48x256xf32> to vector<16x256xf32>
    %127 = arith.mulf %125, %126 : vector<16x256xf32>
    %128 = vector.extract_strided_slice %111 {offsets = [16, 0], sizes = [16, 256], strides = [1, 1]} : vector<48x256xf32> to vector<16x256xf32>
    %129 = vector.extract_strided_slice %111 {offsets = [16, 0], sizes = [16, 256], strides = [1, 1]} : vector<48x256xf32> to vector<16x256xf32>
    %130 = arith.mulf %128, %129 : vector<16x256xf32>
    %131 = arith.addf %127, %130 : vector<16x256xf32>
    %132 = vector.extract_strided_slice %111 {offsets = [32, 0], sizes = [16, 256], strides = [1, 1]} : vector<48x256xf32> to vector<16x256xf32>
    %133 = vector.extract_strided_slice %111 {offsets = [32, 0], sizes = [16, 256], strides = [1, 1]} : vector<48x256xf32> to vector<16x256xf32>
    %134 = arith.mulf %132, %133 : vector<16x256xf32>
    %135 = arith.addf %131, %134 : vector<16x256xf32>
    %c0_37 = arith.constant 0 : index
    %c0_38 = arith.constant 0 : index
    %136 = vector.load %arg12[%c0_37, %c0_38] : memref<16x16xf32, #tpu.memory_space<vmem>>, vector<16x16xf32>
    %cst_39 = arith.constant dense<0.000000e+00> : vector<16x256xf32>
    %137 = tpu.matmul %136, %135, %cst_39 {dimension_numbers = #tpu.dot_dimension_numbers<[1], [0], [0], [1], [0, 0, 1, 1], [], []>} : vector<16x16xf32>, vector<16x256xf32>, vector<16x256xf32> -> vector<16x256xf32>
    %cst_40 = arith.constant 9.99999974E-6 : f32
    %138 = vector.broadcast %cst_40 : f32 to vector<16x256xf32>
    %139 = arith.addf %137, %138 : vector<16x256xf32>
    %140 = math.rsqrt %139 : vector<16x256xf32>
    %141 = vector.broadcast %10 : vector<16x1xf32> to vector<16x256xf32>
    %142 = arith.mulf %140, %141 : vector<16x256xf32>
    %143 = arith.addf %1, %124 : vector<32x256xf32>
    %144 = arith.truncf %143 : vector<32x256xf32> to vector<32x256xbf16>
    %c0_41 = arith.constant 0 : index
    %c0_42 = arith.constant 0 : index
    %145 = vector.load %arg14[%c0_41, %c0_42] : memref<32x256xbf16, #tpu.memory_space<vmem>>, vector<32x256xbf16>
    tpu.vector_store %arg14[%c0_41, %c0_42], %144 {strides = array<i32>} : memref<32x256xbf16, #tpu.memory_space<vmem>>, vector<32x256xbf16>,
    %146 = vector.extract_strided_slice %3 {offsets = [0, 0], sizes = [16, 256], strides = [1, 1]} : vector<48x256xf32> to vector<16x256xf32>
    %147 = vector.extract_strided_slice %111 {offsets = [0, 0], sizes = [16, 256], strides = [1, 1]} : vector<48x256xf32> to vector<16x256xf32>
    %148 = arith.mulf %147, %142 : vector<16x256xf32>
    %149 = arith.addf %146, %148 : vector<16x256xf32>
    %150 = arith.truncf %149 : vector<16x256xf32> to vector<16x256xbf16>
    %c0_43 = arith.constant 0 : index
    %c0_44 = arith.constant 0 : index
    %151 = vector.load %arg15[%c0_43, %c0_44] : memref<48x256xbf16, #tpu.memory_space<vmem>>, vector<16x256xbf16>
    tpu.vector_store %arg15[%c0_43, %c0_44], %150 {strides = array<i32>} : memref<48x256xbf16, #tpu.memory_space<vmem>>, vector<16x256xbf16>,
    %152 = vector.extract_strided_slice %3 {offsets = [16, 0], sizes = [16, 256], strides = [1, 1]} : vector<48x256xf32> to vector<16x256xf32>
    %153 = vector.extract_strided_slice %111 {offsets = [16, 0], sizes = [16, 256], strides = [1, 1]} : vector<48x256xf32> to vector<16x256xf32>
    %154 = arith.mulf %153, %142 : vector<16x256xf32>
    %155 = arith.addf %152, %154 : vector<16x256xf32>
    %156 = arith.truncf %155 : vector<16x256xf32> to vector<16x256xbf16>
    %c16 = arith.constant 16 : index
    %c0_45 = arith.constant 0 : index
    %157 = vector.load %arg15[%c16, %c0_45] : memref<48x256xbf16, #tpu.memory_space<vmem>>, vector<16x256xbf16>
    tpu.vector_store %arg15[%c16, %c0_45], %156 {strides = array<i32>} : memref<48x256xbf16, #tpu.memory_space<vmem>>, vector<16x256xbf16>,
    %158 = vector.extract_strided_slice %3 {offsets = [32, 0], sizes = [16, 256], strides = [1, 1]} : vector<48x256xf32> to vector<16x256xf32>
    %159 = vector.extract_strided_slice %111 {offsets = [32, 0], sizes = [16, 256], strides = [1, 1]} : vector<48x256xf32> to vector<16x256xf32>
    %160 = arith.mulf %159, %142 : vector<16x256xf32>
    %161 = arith.addf %158, %160 : vector<16x256xf32>
    %162 = arith.truncf %161 : vector<16x256xf32> to vector<16x256xbf16>
    %c32 = arith.constant 32 : index
    %c0_46 = arith.constant 0 : index
    %163 = vector.load %arg15[%c32, %c0_46] : memref<48x256xbf16, #tpu.memory_space<vmem>>, vector<16x256xbf16>
    tpu.vector_store %arg15[%c32, %c0_46], %162 {strides = array<i32>} : memref<48x256xbf16, #tpu.memory_space<vmem>>, vector<16x256xbf16>,
    return
  }
  func.func @transform_0(%arg0: i32) -> (i32, i32) {
    %c0_i32 = arith.constant 0 : i32
    %c0_i32_0 = arith.constant 0 : i32
    return %c0_i32, %arg0 : i32, i32
  }
  func.func @transform_1(%arg0: i32) -> (i32, i32) {
    %c0_i32 = arith.constant 0 : i32
    %c0_i32_0 = arith.constant 0 : i32
    return %c0_i32, %arg0 : i32, i32
  }
  func.func @transform_2(%arg0: i32) -> (i32, i32) {
    %c0_i32 = arith.constant 0 : i32
    %c0_i32_0 = arith.constant 0 : i32
    %c0_i32_1 = arith.constant 0 : i32
    return %c0_i32, %c0_i32_0 : i32, i32
  }
  func.func @transform_3(%arg0: i32) -> (i32, i32) {
    %c0_i32 = arith.constant 0 : i32
    %c0_i32_0 = arith.constant 0 : i32
    %c0_i32_1 = arith.constant 0 : i32
    return %c0_i32, %c0_i32_0 : i32, i32
  }
  func.func @transform_4(%arg0: i32) -> (i32, i32) {
    %c0_i32 = arith.constant 0 : i32
    %c0_i32_0 = arith.constant 0 : i32
    %c0_i32_1 = arith.constant 0 : i32
    return %c0_i32, %c0_i32_0 : i32, i32
  }
  func.func @transform_5(%arg0: i32) -> (i32, i32) {
    %c0_i32 = arith.constant 0 : i32
    %c0_i32_0 = arith.constant 0 : i32
    %c0_i32_1 = arith.constant 0 : i32
    return %c0_i32, %c0_i32_0 : i32, i32
  }
  func.func @transform_6(%arg0: i32) -> (i32, i32) {
    %c0_i32 = arith.constant 0 : i32
    %c0_i32_0 = arith.constant 0 : i32
    %c0_i32_1 = arith.constant 0 : i32
    return %c0_i32, %c0_i32_0 : i32, i32
  }
  func.func @transform_7(%arg0: i32) -> (i32, i32) {
    %c0_i32 = arith.constant 0 : i32
    %c0_i32_0 = arith.constant 0 : i32
    %c0_i32_1 = arith.constant 0 : i32
    return %c0_i32, %c0_i32_0 : i32, i32
  }
  func.func @transform_8(%arg0: i32) -> (i32, i32) {
    %c0_i32 = arith.constant 0 : i32
    %c0_i32_0 = arith.constant 0 : i32
    %c0_i32_1 = arith.constant 0 : i32
    return %c0_i32, %c0_i32_0 : i32, i32
  }
  func.func @transform_9(%arg0: i32) -> (i32, i32) {
    %c0_i32 = arith.constant 0 : i32
    %c0_i32_0 = arith.constant 0 : i32
    %c0_i32_1 = arith.constant 0 : i32
    return %c0_i32, %c0_i32_0 : i32, i32
  }
  func.func @transform_10(%arg0: i32) -> (i32, i32) {
    %c0_i32 = arith.constant 0 : i32
    %c0_i32_0 = arith.constant 0 : i32
    %c0_i32_1 = arith.constant 0 : i32
    return %c0_i32, %c0_i32_0 : i32, i32
  }
  func.func @transform_11(%arg0: i32) -> (i32, i32) {
    %c0_i32 = arith.constant 0 : i32
    %c0_i32_0 = arith.constant 0 : i32
    %c0_i32_1 = arith.constant 0 : i32
    return %c0_i32, %c0_i32_0 : i32, i32
  }
  func.func @transform_12(%arg0: i32) -> (i32, i32) {
    %c0_i32 = arith.constant 0 : i32
    %c0_i32_0 = arith.constant 0 : i32
    %c0_i32_1 = arith.constant 0 : i32
    return %c0_i32, %c0_i32_0 : i32, i32
  }
  func.func @transform_13(%arg0: i32) -> (i32, i32) {
    %c0_i32 = arith.constant 0 : i32
    %c0_i32_0 = arith.constant 0 : i32
    return %c0_i32, %arg0 : i32, i32
  }
  func.func @transform_14(%arg0: i32) -> (i32, i32) {
    %c0_i32 = arith.constant 0 : i32
    %c0_i32_0 = arith.constant 0 : i32
    return %c0_i32, %arg0 : i32, i32
  }
}

</mosaic_0001>

<llo_original>
// kernel: tpu_custom_call.1
$region0: #{tpu_custom_call.1}
  #allocation0 [shape = 'u32[]', space=smem, size = 0x4, offset = 0x4, fixed_abs, tag = 'smem constant byte address 0x4 - core index']
  #allocation1 [shape = 'u32[144,128]{1,0:T(1,128)}', space=vmem, size = 0x12000, scoped, tag = 'internal scratch']
  %s0 = inlined_call_operand.vmem [shape: bf16[32,512], index: 0, kind: input, shape index: {}]
  %s1 = inlined_call_operand.vmem [shape: bf16[48,512], index: 1, kind: input, shape index: {}]
  %s2 = inlined_call_operand.vmem [shape: f32[40,32], index: 2, kind: input, shape index: {}]
  %s3 = inlined_call_operand.vmem [shape: f32[32,32], index: 3, kind: input, shape index: {}]
  %s4 = inlined_call_operand.vmem [shape: f32[32,32], index: 4, kind: input, shape index: {}]
  %s5 = inlined_call_operand.vmem [shape: f32[32,8], index: 5, kind: input, shape index: {}]
  %s6 = inlined_call_operand.vmem [shape: f32[96,48], index: 6, kind: input, shape index: {}]
  %s7 = inlined_call_operand.vmem [shape: f32[48,48], index: 7, kind: input, shape index: {}]
  %s8 = inlined_call_operand.vmem [shape: f32[48,48], index: 8, kind: input, shape index: {}]
  %s9 = inlined_call_operand.vmem [shape: f32[48,24], index: 9, kind: input, shape index: {}]
  %s10 = inlined_call_operand.vmem [shape: f32[32,32], index: 10, kind: input, shape index: {}]
  %s11 = inlined_call_operand.vmem [shape: f32[16,16], index: 11, kind: input, shape index: {}]
  %s12 = inlined_call_operand.vmem [shape: f32[184,1], index: 12, kind: input, shape index: {}]
  %s13 = inlined_call_operand.hbm [shape: bf16[32,512], index: 13, kind: output, shape index: {0}]
  %s14 = inlined_call_operand.hbm [shape: bf16[48,512], index: 14, kind: output, shape index: {1}]
  %15 = xla_tuple %s13, %s14
  %s16 = sld [smem:[#allocation0]]
  $region169: #{tpu_custom_call.1} parent=0
    _
  %s18 = ssub.s32 1, %s16
  %s19 = scalar_select 0, %s18, %s16
  $region1: #{tpu_custom_call.1} parent=0
    #allocation2 [shape = 'u8[32768]{0}', space=vmem, size = 0x8000, scoped, tag = 'input window, operand 0']
    #allocation3 [shape = 'u8[49152]{0}', space=vmem, size = 0xc000, scoped, tag = 'input window, operand 1']
    #allocation4 [shape = 'u8[32768]{0}', space=vmem, size = 0x8000, scoped, tag = 'output window, operand 0']
    #allocation5 [shape = 's32[2]{0}', space=sflag, size = 0x8, scoped, tag = 'scoped memory for tpu_custom_call.1']
    #allocation6 [shape = 'u8[49152]{0}', space=vmem, size = 0xc000, scoped, tag = 'output window, operand 1']
    #allocation7 [shape = 's32[2]{0}', space=sflag, size = 0x8, scoped, tag = 'scoped memory for tpu_custom_call.1']
    %20 = vsyncpa [#allocation5], 0
    %s21 = scalar_lea.sflag [#allocation5], 1
    %22 = vsyncpa %s21, 0
    %23 = vsyncpa [#allocation7], 0
    %s24 = scalar_lea.sflag [#allocation7], 1
    %25 = vsyncpa %s24, 0
    loop: start=0, step=1, limit=4
    $region2: #{tpu_custom_call.1} parent=1 // loop_pre_header
      _
    $region3: #{tpu_custom_call.1} parent=1 // loop_header
      %s27 = sphi 0, %s31
      %p28 = scmp.ge.s32.totalorder %s27, 4
      %s37 = sphi 0, %s39
      %s40 = sphi 0, %s37
      %s41 = sphi 0, %s40
      %s57 = sphi 0, %s41
      %s63 = sphi 0, %s65
      %s66 = sphi 0, %s63
      %s67 = sphi 0, %s66
      %s83 = sphi 0, %s67
      %s87 = sphi 0, %s87
      %s89 = sphi 0, %s87
      %s90 = sphi 0, %s89
      %s104 = sphi 0, %s90
      %s108 = sphi 0, %s108
      %s110 = sphi 0, %s108
      %s111 = sphi 0, %s110
      %s125 = sphi 0, %s111
      %s129 = sphi 0, %s129
      %s131 = sphi 0, %s129
      %s132 = sphi 0, %s131
      %s146 = sphi 0, %s132
      %s150 = sphi 0, %s150
      %s152 = sphi 0, %s150
      %s153 = sphi 0, %s152
      %s167 = sphi 0, %s153
      %s171 = sphi 0, %s171
      %s173 = sphi 0, %s171
      %s174 = sphi 0, %s173
      %s188 = sphi 0, %s174
      %s192 = sphi 0, %s192
      %s194 = sphi 0, %s192
      %s195 = sphi 0, %s194
      %s209 = sphi 0, %s195
      %s213 = sphi 0, %s213
      %s215 = sphi 0, %s213
      %s216 = sphi 0, %s215
      %s230 = sphi 0, %s216
      %s234 = sphi 0, %s234
      %s236 = sphi 0, %s234
      %s237 = sphi 0, %s236
      %s251 = sphi 0, %s237
      %s255 = sphi 0, %s255
      %s257 = sphi 0, %s255
      %s258 = sphi 0, %s257
      %s272 = sphi 0, %s258
      %s276 = sphi 0, %s276
      %s278 = sphi 0, %s276
      %s279 = sphi 0, %s278
      %s293 = sphi 0, %s279
      %s297 = sphi 0, %s297
      %s299 = sphi 0, %s297
      %s300 = sphi 0, %s299
      %s314 = sphi 0, %s300
      %s320 = sphi 0, %s322
      %s323 = sphi 0, %s320
      %s324 = sphi 0, %s323
      %s340 = sphi 0, %s324
      %s346 = sphi 0, %s348
      %s349 = sphi 0, %s346
      %s350 = sphi 0, %s349
      %s366 = sphi 0, %s350
    $region4: #{tpu_custom_call.1} parent=1 // loop_header_branch
      %30 = sbr.rel (%p28) target = $region8
    $region5: #{tpu_custom_call.1} parent=1 // loop_body
      %s32 = ssub.s32 %s27, 1
      %s33 = ssub.s32 %s27, 2
      %s34 = sadd.s32 %s27, 1
      %s35 = ssub.s32 %s27, %s34
      %p36 = scmp.eq.s32.totalorder %s35, 0
      %s38 = sadd.s32 %s37, 1
      %s39 = scalar_select %p36, %s37, %s38
      %p42 = pneg %p36
      %p43 = scmp.eq.s32.totalorder %s27, 1
      %p44 = por %p42, %p43
      %p45 = scmp.ne.s32.totalorder %s37, %s40
      %p46 = scmp.eq.s32.totalorder %s27, 0
      %p47 = por %p45, %p46
      %p48 = scmp.ne.s32.totalorder %s37, %s40
      %p49 = scmp.eq.s32.totalorder %s32, 1
      %p50 = por %p48, %p49
      %p51 = scmp.ne.s32.totalorder %s40, %s41
      %p52 = scmp.eq.s32.totalorder %s32, 0
      %p53 = por %p51, %p52
      %p54 = scmp.ne.s32.totalorder %s40, %s41
      %p55 = scmp.eq.s32.totalorder %s33, 1
      %p56 = por %p54, %p55
      %p58 = scmp.ne.s32.totalorder %s41, %s57
      %p59 = scmp.eq.s32.totalorder %s33, 0
      %p60 = por %p58, %p59
      %s61 = ssub.s32 %s27, %s34
      %p62 = scmp.eq.s32.totalorder %s61, 0
      %s64 = sadd.s32 %s63, 1
      %s65 = scalar_select %p62, %s63, %s64
      %p68 = pneg %p62
      %p69 = scmp.eq.s32.totalorder %s27, 1
      %p70 = por %p68, %p69
      %p71 = scmp.ne.s32.totalorder %s63, %s66
      %p72 = scmp.eq.s32.totalorder %s27, 0
      %p73 = por %p71, %p72
      %p74 = scmp.ne.s32.totalorder %s63, %s66
      %p75 = scmp.eq.s32.totalorder %s32, 1
      %p76 = por %p74, %p75
      %p77 = scmp.ne.s32.totalorder %s66, %s67
      %p78 = scmp.eq.s32.totalorder %s32, 0
      %p79 = por %p77, %p78
      %p80 = scmp.ne.s32.totalorder %s66, %s67
      %p81 = scmp.eq.s32.totalorder %s33, 1
      %p82 = por %p80, %p81
      %p84 = scmp.ne.s32.totalorder %s67, %s83
      %p85 = scmp.eq.s32.totalorder %s33, 0
      %p86 = por %p84, %p85
      %s88 = sadd.s32 %s87, 1
      %p91 = scmp.eq.s32.totalorder %s27, 1
      %p92 = scmp.ne.s32.totalorder %s87, %s89
      %p93 = scmp.eq.s32.totalorder %s27, 0
      %p94 = por %p92, %p93
      %p95 = scmp.ne.s32.totalorder %s87, %s89
      %p96 = scmp.eq.s32.totalorder %s32, 1
      %p97 = por %p95, %p96
      %p98 = scmp.ne.s32.totalorder %s89, %s90
      %p99 = scmp.eq.s32.totalorder %s32, 0
      %p100 = por %p98, %p99
      %p101 = scmp.ne.s32.totalorder %s89, %s90
      %p102 = scmp.eq.s32.totalorder %s33, 1
      %p103 = por %p101, %p102
      %p105 = scmp.ne.s32.totalorder %s90, %s104
      %p106 = scmp.eq.s32.totalorder %s33, 0
      %p107 = por %p105, %p106
      %s109 = sadd.s32 %s108, 1
      %p112 = scmp.eq.s32.totalorder %s27, 1
      %p113 = scmp.ne.s32.totalorder %s108, %s110
      %p114 = scmp.eq.s32.totalorder %s27, 0
      %p115 = por %p113, %p114
      %p116 = scmp.ne.s32.totalorder %s108, %s110
      %p117 = scmp.eq.s32.totalorder %s32, 1
      %p118 = por %p116, %p117
      %p119 = scmp.ne.s32.totalorder %s110, %s111
      %p120 = scmp.eq.s32.totalorder %s32, 0
      %p121 = por %p119, %p120
      %p122 = scmp.ne.s32.totalorder %s110, %s111
      %p123 = scmp.eq.s32.totalorder %s33, 1
      %p124 = por %p122, %p123
      %p126 = scmp.ne.s32.totalorder %s111, %s125
      %p127 = scmp.eq.s32.totalorder %s33, 0
      %p128 = por %p126, %p127
      %s130 = sadd.s32 %s129, 1
      %p133 = scmp.eq.s32.totalorder %s27, 1
      %p134 = scmp.ne.s32.totalorder %s129, %s131
      %p135 = scmp.eq.s32.totalorder %s27, 0
      %p136 = por %p134, %p135
      %p137 = scmp.ne.s32.totalorder %s129, %s131
      %p138 = scmp.eq.s32.totalorder %s32, 1
      %p139 = por %p137, %p138
      %p140 = scmp.ne.s32.totalorder %s131, %s132
      %p141 = scmp.eq.s32.totalorder %s32, 0
      %p142 = por %p140, %p141
      %p143 = scmp.ne.s32.totalorder %s131, %s132
      %p144 = scmp.eq.s32.totalorder %s33, 1
      %p145 = por %p143, %p144
      %p147 = scmp.ne.s32.totalorder %s132, %s146
      %p148 = scmp.eq.s32.totalorder %s33, 0
      %p149 = por %p147, %p148
      %s151 = sadd.s32 %s150, 1
      %p154 = scmp.eq.s32.totalorder %s27, 1
      %p155 = scmp.ne.s32.totalorder %s150, %s152
      %p156 = scmp.eq.s32.totalorder %s27, 0
      %p157 = por %p155, %p156
      %p158 = scmp.ne.s32.totalorder %s150, %s152
      %p159 = scmp.eq.s32.totalorder %s32, 1
      %p160 = por %p158, %p159
      %p161 = scmp.ne.s32.totalorder %s152, %s153
      %p162 = scmp.eq.s32.totalorder %s32, 0
      %p163 = por %p161, %p162
      %p164 = scmp.ne.s32.totalorder %s152, %s153
      %p165 = scmp.eq.s32.totalorder %s33, 1
      %p166 = por %p164, %p165
      %p168 = scmp.ne.s32.totalorder %s153, %s167
      %p169 = scmp.eq.s32.totalorder %s33, 0
      %p170 = por %p168, %p169
      %s172 = sadd.s32 %s171, 1
      %p175 = scmp.eq.s32.totalorder %s27, 1
      %p176 = scmp.ne.s32.totalorder %s171, %s173
      %p177 = scmp.eq.s32.totalorder %s27, 0
      %p178 = por %p176, %p177
      %p179 = scmp.ne.s32.totalorder %s171, %s173
      %p180 = scmp.eq.s32.totalorder %s32, 1
      %p181 = por %p179, %p180
      %p182 = scmp.ne.s32.totalorder %s173, %s174
      %p183 = scmp.eq.s32.totalorder %s32, 0
      %p184 = por %p182, %p183
      %p185 = scmp.ne.s32.totalorder %s173, %s174
      %p186 = scmp.eq.s32.totalorder %s33, 1
      %p187 = por %p185, %p186
      %p189 = scmp.ne.s32.totalorder %s174, %s188
      %p190 = scmp.eq.s32.totalorder %s33, 0
      %p191 = por %p189, %p190
      %s193 = sadd.s32 %s192, 1
      %p196 = scmp.eq.s32.totalorder %s27, 1
      %p197 = scmp.ne.s32.totalorder %s192, %s194
      %p198 = scmp.eq.s32.totalorder %s27, 0
      %p199 = por %p197, %p198
      %p200 = scmp.ne.s32.totalorder %s192, %s194
      %p201 = scmp.eq.s32.totalorder %s32, 1
      %p202 = por %p200, %p201
      %p203 = scmp.ne.s32.totalorder %s194, %s195
      %p204 = scmp.eq.s32.totalorder %s32, 0
      %p205 = por %p203, %p204
      %p206 = scmp.ne.s32.totalorder %s194, %s195
      %p207 = scmp.eq.s32.totalorder %s33, 1
      %p208 = por %p206, %p207
      %p210 = scmp.ne.s32.totalorder %s195, %s209
      %p211 = scmp.eq.s32.totalorder %s33, 0
      %p212 = por %p210, %p211
      %s214 = sadd.s32 %s213, 1
      %p217 = scmp.eq.s32.totalorder %s27, 1
      %p218 = scmp.ne.s32.totalorder %s213, %s215
      %p219 = scmp.eq.s32.totalorder %s27, 0
      %p220 = por %p218, %p219
      %p221 = scmp.ne.s32.totalorder %s213, %s215
      %p222 = scmp.eq.s32.totalorder %s32, 1
      %p223 = por %p221, %p222
      %p224 = scmp.ne.s32.totalorder %s215, %s216
      %p225 = scmp.eq.s32.totalorder %s32, 0
      %p226 = por %p224, %p225
      %p227 = scmp.ne.s32.totalorder %s215, %s216
      %p228 = scmp.eq.s32.totalorder %s33, 1
      %p229 = por %p227, %p228
      %p231 = scmp.ne.s32.totalorder %s216, %s230
      %p232 = scmp.eq.s32.totalorder %s33, 0
      %p233 = por %p231, %p232
      %s235 = sadd.s32 %s234, 1
      %p238 = scmp.eq.s32.totalorder %s27, 1
      %p239 = scmp.ne.s32.totalorder %s234, %s236
      %p240 = scmp.eq.s32.totalorder %s27, 0
      %p241 = por %p239, %p240
      %p242 = scmp.ne.s32.totalorder %s234, %s236
      %p243 = scmp.eq.s32.totalorder %s32, 1
      %p244 = por %p242, %p243
      %p245 = scmp.ne.s32.totalorder %s236, %s237
      %p246 = scmp.eq.s32.totalorder %s32, 0
      %p247 = por %p245, %p246
      %p248 = scmp.ne.s32.totalorder %s236, %s237
      %p249 = scmp.eq.s32.totalorder %s33, 1
      %p250 = por %p248, %p249
      %p252 = scmp.ne.s32.totalorder %s237, %s251
      %p253 = scmp.eq.s32.totalorder %s33, 0
      %p254 = por %p252, %p253
      %s256 = sadd.s32 %s255, 1
      %p259 = scmp.eq.s32.totalorder %s27, 1
      %p260 = scmp.ne.s32.totalorder %s255, %s257
      %p261 = scmp.eq.s32.totalorder %s27, 0
      %p262 = por %p260, %p261
      %p263 = scmp.ne.s32.totalorder %s255, %s257
      %p264 = scmp.eq.s32.totalorder %s32, 1
      %p265 = por %p263, %p264
      %p266 = scmp.ne.s32.totalorder %s257, %s258
      %p267 = scmp.eq.s32.totalorder %s32, 0
      %p268 = por %p266, %p267
      %p269 = scmp.ne.s32.totalorder %s257, %s258
      %p270 = scmp.eq.s32.totalorder %s33, 1
      %p271 = por %p269, %p270
      %p273 = scmp.ne.s32.totalorder %s258, %s272
      %p274 = scmp.eq.s32.totalorder %s33, 0
      %p275 = por %p273, %p274
      %s277 = sadd.s32 %s276, 1
      %p280 = scmp.eq.s32.totalorder %s27, 1
      %p281 = scmp.ne.s32.totalorder %s276, %s278
      %p282 = scmp.eq.s32.totalorder %s27, 0
      %p283 = por %p281, %p282
      %p284 = scmp.ne.s32.totalorder %s276, %s278
      %p285 = scmp.eq.s32.totalorder %s32, 1
      %p286 = por %p284, %p285
      %p287 = scmp.ne.s32.totalorder %s278, %s279
      %p288 = scmp.eq.s32.totalorder %s32, 0
      %p289 = por %p287, %p288
      %p290 = scmp.ne.s32.totalorder %s278, %s279
      %p291 = scmp.eq.s32.totalorder %s33, 1
      %p292 = por %p290, %p291
      %p294 = scmp.ne.s32.totalorder %s279, %s293
      %p295 = scmp.eq.s32.totalorder %s33, 0
      %p296 = por %p294, %p295
      %s298 = sadd.s32 %s297, 1
      %p301 = scmp.eq.s32.totalorder %s27, 1
      %p302 = scmp.ne.s32.totalorder %s297, %s299
      %p303 = scmp.eq.s32.totalorder %s27, 0
      %p304 = por %p302, %p303
      %p305 = scmp.ne.s32.totalorder %s297, %s299
      %p306 = scmp.eq.s32.totalorder %s32, 1
      %p307 = por %p305, %p306
      %p308 = scmp.ne.s32.totalorder %s299, %s300
      %p309 = scmp.eq.s32.totalorder %s32, 0
      %p310 = por %p308, %p309
      %p311 = scmp.ne.s32.totalorder %s299, %s300
      %p312 = scmp.eq.s32.totalorder %s33, 1
      %p313 = por %p311, %p312
      %p315 = scmp.ne.s32.totalorder %s300, %s314
      %p316 = scmp.eq.s32.totalorder %s33, 0
      %p317 = por %p315, %p316
      %s318 = ssub.s32 %s27, %s34
      %p319 = scmp.eq.s32.totalorder %s318, 0
      %s321 = sadd.s32 %s320, 1
      %s322 = scalar_select %p319, %s320, %s321
      %p325 = pneg %p319
      %p326 = scmp.eq.s32.totalorder %s27, 1
      %p327 = por %p325, %p326
      %p328 = scmp.ne.s32.totalorder %s320, %s323
      %p329 = scmp.eq.s32.totalorder %s27, 0
      %p330 = por %p328, %p329
      %p331 = scmp.ne.s32.totalorder %s320, %s323
      %p332 = scmp.eq.s32.totalorder %s32, 1
      %p333 = por %p331, %p332
      %p334 = scmp.ne.s32.totalorder %s323, %s324
      %p335 = scmp.eq.s32.totalorder %s32, 0
      %p336 = por %p334, %p335
      %p337 = scmp.ne.s32.totalorder %s323, %s324
      %p338 = scmp.eq.s32.totalorder %s33, 1
      %p339 = por %p337, %p338
      %p341 = scmp.ne.s32.totalorder %s324, %s340
      %p342 = scmp.eq.s32.totalorder %s33, 0
      %p343 = por %p341, %p342
      %s344 = ssub.s32 %s27, %s34
      %p345 = scmp.eq.s32.totalorder %s344, 0
      %s347 = sadd.s32 %s346, 1
      %s348 = scalar_select %p345, %s346, %s347
      %p351 = pneg %p345
      %p352 = scmp.eq.s32.totalorder %s27, 1
      %p353 = por %p351, %p352
      %p354 = scmp.ne.s32.totalorder %s346, %s349
      %p355 = scmp.eq.s32.totalorder %s27, 0
      %p356 = por %p354, %p355
      %p357 = scmp.ne.s32.totalorder %s346, %s349
      %p358 = scmp.eq.s32.totalorder %s32, 1
      %p359 = por %p357, %p358
      %p360 = scmp.ne.s32.totalorder %s349, %s350
      %p361 = scmp.eq.s32.totalorder %s32, 0
      %p362 = por %p360, %p361
      %p363 = scmp.ne.s32.totalorder %s349, %s350
      %p364 = scmp.eq.s32.totalorder %s33, 1
      %p365 = por %p363, %p364
      %p367 = scmp.ne.s32.totalorder %s350, %s366
      %p368 = scmp.eq.s32.totalorder %s33, 0
      %p369 = por %p367, %p368
      %p370 = scmp.le.s32.totalorder 1, %s27
      %p371 = scmp.lt.s32.totalorder %s27, 3
      %p372 = pnand %p370, %p371
      %p373 = pneg %p372
      // Predicated region
      $region9: #{tpu_custom_call.1} parent=5 // pred_check
        _
      $region10: #{tpu_custom_call.1} parent=5 // pred_check_branch
        %375 = sbr.rel (%p372) target = $region12
      $region11: #{tpu_custom_call.1} parent=5 // pred_region
        %s376 = ssub.s32 %s27, 1
        // Predicated region
        $region13: #{tpu_custom_call.1} parent=11 // pred_check
          %p377 = pneg %p100
        $region14: #{tpu_custom_call.1} parent=11 // pred_check_branch
          %379 = sbr.rel (%p377) target = $region16
        $region15: #{tpu_custom_call.1} parent=11 // pred_region
          _
        $region16: #{tpu_custom_call.1} parent=11 // pred_fallthru
          _
        // Predicated region
        $region17: #{tpu_custom_call.1} parent=11 // pred_check
          %p380 = pneg %p121
        $region18: #{tpu_custom_call.1} parent=11 // pred_check_branch
          %382 = sbr.rel (%p380) target = $region20
        $region19: #{tpu_custom_call.1} parent=11 // pred_region
          _
        $region20: #{tpu_custom_call.1} parent=11 // pred_fallthru
          _
        // Predicated region
        $region21: #{tpu_custom_call.1} parent=11 // pred_check
          %p383 = pneg %p142
        $region22: #{tpu_custom_call.1} parent=11 // pred_check_branch
          %385 = sbr.rel (%p383) target = $region24
        $region23: #{tpu_custom_call.1} parent=11 // pred_region
          _
        $region24: #{tpu_custom_call.1} parent=11 // pred_fallthru
          _
        // Predicated region
        $region25: #{tpu_custom_call.1} parent=11 // pred_check
          %p386 = pneg %p163
        $region26: #{tpu_custom_call.1} parent=11 // pred_check_branch
          %388 = sbr.rel (%p386) target = $region28
        $region27: #{tpu_custom_call.1} parent=11 // pred_region
          _
        $region28: #{tpu_custom_call.1} parent=11 // pred_fallthru
          _
        // Predicated region
        $region29: #{tpu_custom_call.1} parent=11 // pred_check
          %p389 = pneg %p184
        $region30: #{tpu_custom_call.1} parent=11 // pred_check_branch
          %391 = sbr.rel (%p389) target = $region32
        $region31: #{tpu_custom_call.1} parent=11 // pred_region
          _
        $region32: #{tpu_custom_call.1} parent=11 // pred_fallthru
          _
        // Predicated region
        $region33: #{tpu_custom_call.1} parent=11 // pred_check
          %p392 = pneg %p205
        $region34: #{tpu_custom_call.1} parent=11 // pred_check_branch
          %394 = sbr.rel (%p392) target = $region36
        $region35: #{tpu_custom_call.1} parent=11 // pred_region
          _
        $region36: #{tpu_custom_call.1} parent=11 // pred_fallthru
          _
        // Predicated region
        $region37: #{tpu_custom_call.1} parent=11 // pred_check
          %p395 = pneg %p226
        $region38: #{tpu_custom_call.1} parent=11 // pred_check_branch
          %397 = sbr.rel (%p395) target = $region40
        $region39: #{tpu_custom_call.1} parent=11 // pred_region
          _
        $region40: #{tpu_custom_call.1} parent=11 // pred_fallthru
          _
        // Predicated region
        $region41: #{tpu_custom_call.1} parent=11 // pred_check
          %p398 = pneg %p247
        $region42: #{tpu_custom_call.1} parent=11 // pred_check_branch
          %400 = sbr.rel (%p398) target = $region44
        $region43: #{tpu_custom_call.1} parent=11 // pred_region
          _
        $region44: #{tpu_custom_call.1} parent=11 // pred_fallthru
          _
        // Predicated region
        $region45: #{tpu_custom_call.1} parent=11 // pred_check
          %p401 = pneg %p268
        $region46: #{tpu_custom_call.1} parent=11 // pred_check_branch
          %403 = sbr.rel (%p401) target = $region48
        $region47: #{tpu_custom_call.1} parent=11 // pred_region
          _
        $region48: #{tpu_custom_call.1} parent=11 // pred_fallthru
          _
        // Predicated region
        $region49: #{tpu_custom_call.1} parent=11 // pred_check
          %p404 = pneg %p289
        $region50: #{tpu_custom_call.1} parent=11 // pred_check_branch
          %406 = sbr.rel (%p404) target = $region52
        $region51: #{tpu_custom_call.1} parent=11 // pred_region
          _
        $region52: #{tpu_custom_call.1} parent=11 // pred_fallthru
          _
        // Predicated region
        $region53: #{tpu_custom_call.1} parent=11 // pred_check
          %p407 = pneg %p310
        $region54: #{tpu_custom_call.1} parent=11 // pred_check_branch
          %409 = sbr.rel (%p407) target = $region56
        $region55: #{tpu_custom_call.1} parent=11 // pred_region
          _
        $region56: #{tpu_custom_call.1} parent=11 // pred_fallthru
          _
      $region12: #{tpu_custom_call.1} parent=5 // pred_fallthru
        _
      %p410 = scmp.lt.s32.totalorder %s27, 2
      // Predicated region
      $region57: #{tpu_custom_call.1} parent=5 // pred_check
        %p411 = pneg %p410
      $region58: #{tpu_custom_call.1} parent=5 // pred_check_branch
        %413 = sbr.rel (%p411) target = $region60
      $region59: #{tpu_custom_call.1} parent=5 // pred_region
        // Predicated region
        $region61: #{tpu_custom_call.1} parent=59 // pred_check
          %p414 = pneg %p47
        $region62: #{tpu_custom_call.1} parent=59 // pred_check_branch
          %416 = sbr.rel (%p414) target = $region64
        $region63: #{tpu_custom_call.1} parent=59 // pred_region
          %s417 = sand.u32 %s37, 1
          %s418 = sand.u32 %s37, 1
          %s419 = smul.addr %s418, 32
          %s420 = scalar_lea.vmem [#allocation2], %s419
          %s421 = smul.u32 2, %s27
          %s422 = smul.addr %s421, 4
          %s423 = scalar_lea.vmem %s0, %s422
          // Predicated region
          $region65: #{tpu_custom_call.1} parent=63 // pred_check
            _
          $region66: #{tpu_custom_call.1} parent=63 // pred_check_branch
            %425 = sbr.rel (0) target = $region68
          $region67: #{tpu_custom_call.1} parent=63 // pred_region
            // Predicated region
            $region69: #{tpu_custom_call.1} parent=67 // pred_check
              _
            $region70: #{tpu_custom_call.1} parent=67 // pred_check_branch
              %427 = sbr.rel (0) target = $region72
            $region71: #{tpu_custom_call.1} parent=67 // pred_region
              // Predicated region
              $region84: #{tpu_custom_call.1} parent=71 // pred_check
                _
              $region85: #{tpu_custom_call.1} parent=71 // pred_check_branch
                %448 = sbr.rel (0) target = $region87
              $region86: #{tpu_custom_call.1} parent=71 // pred_region
                loop: start=0, step=1, limit=1
                $region88: #{tpu_custom_call.1} parent=86 // loop_pre_header
                  _
                $region89: #{tpu_custom_call.1} parent=86 // loop_header
                  %s450 = sphi 0, %s454
                  %p451 = scmp.ge.s32.totalorder %s450, 1
                  %s455 = sphi %s423, %s423
                  %s456 = sphi %s420, %s420
                $region90: #{tpu_custom_call.1} parent=86 // loop_header_branch
                  %453 = sbr.rel (%p451) target = $region94
                $region91: #{tpu_custom_call.1} parent=86 // loop_body
                  %v457 = vld [vmem:[%s455] sm:$0xff]
                  %458 = vst [vmem:[%s456] sm:$0xff] %v457
                  %v459 = vld [vmem:[%s455 + $0x10] sm:$0xff]
                  %460 = vst [vmem:[%s456 + $0x8] sm:$0xff] %v459
                  %v461 = vld [vmem:[%s455 + $0x20] sm:$0xff]
                  %462 = vst [vmem:[%s456 + $0x10] sm:$0xff] %v461
                  %v463 = vld [vmem:[%s455 + $0x30] sm:$0xff]
                  %464 = vst [vmem:[%s456 + $0x18] sm:$0xff] %v463
                $region92: #{tpu_custom_call.1} parent=86 // loop_footer
                  %s454 = sadd.s32 1, %s450
                $region93: #{tpu_custom_call.1} parent=86 // loop_footer_branch
                  %449 = sbr.rel target = $region89
                $region94: #{tpu_custom_call.1} parent=86 // loop_exit
                  _
              $region87: #{tpu_custom_call.1} parent=71 // pred_fallthru
                _
              // Predicated region
              $region95: #{tpu_custom_call.1} parent=71 // pred_check
                _
              $region96: #{tpu_custom_call.1} parent=71 // pred_check_branch
                %466 = sbr.rel target = $region98
              $region97: #{tpu_custom_call.1} parent=71 // pred_region
                _
              $region98: #{tpu_custom_call.1} parent=71 // pred_fallthru
                _
            $region72: #{tpu_custom_call.1} parent=67 // pred_fallthru
              _
            // Predicated region
            $region73: #{tpu_custom_call.1} parent=67 // pred_check
              _
            $region74: #{tpu_custom_call.1} parent=67 // pred_check_branch
              %429 = sbr.rel target = $region76
            $region75: #{tpu_custom_call.1} parent=67 // pred_region
              loop: start=0, step=1, limit=1
              $region77: #{tpu_custom_call.1} parent=75 // loop_pre_header
                _
              $region78: #{tpu_custom_call.1} parent=75 // loop_header
                %s432 = sphi 0, %s436
                %p433 = scmp.ge.s32.totalorder %s432, 1
                %s437 = sphi %s423, %s423
                %s438 = sphi %s420, %s420
              $region79: #{tpu_custom_call.1} parent=75 // loop_header_branch
                %435 = sbr.rel (%p433) target = $region83
              $region80: #{tpu_custom_call.1} parent=75 // loop_body
                %v439 = vld [vmem:[%s437] sm:$0xff]
                %440 = vst [vmem:[%s438] sm:$0xff] %v439
                %v441 = vld [vmem:[%s437 + $0x10] sm:$0xff]
                %442 = vst [vmem:[%s438 + $0x8] sm:$0xff] %v441
                %v443 = vld [vmem:[%s437 + $0x20] sm:$0xff]
                %444 = vst [vmem:[%s438 + $0x10] sm:$0xff] %v443
                %v445 = vld [vmem:[%s437 + $0x30] sm:$0xff]
                %446 = vst [vmem:[%s438 + $0x18] sm:$0xff] %v445
              $region81: #{tpu_custom_call.1} parent=75 // loop_footer
                %s436 = sadd.s32 1, %s432
              $region82: #{tpu_custom_call.1} parent=75 // loop_footer_branch
                %431 = sbr.rel target = $region78
              $region83: #{tpu_custom_call.1} parent=75 // loop_exit
                _
            $region76: #{tpu_custom_call.1} parent=67 // pred_fallthru
              _
          $region68: #{tpu_custom_call.1} parent=63 // pred_fallthru
            _
          %467 = vnop
        $region64: #{tpu_custom_call.1} parent=59 // pred_fallthru
          _
        // Predicated region
        $region99: #{tpu_custom_call.1} parent=59 // pred_check
          %p468 = pneg %p73
        $region100: #{tpu_custom_call.1} parent=59 // pred_check_branch
          %470 = sbr.rel (%p468) target = $region102
        $region101: #{tpu_custom_call.1} parent=59 // pred_region
          %s471 = sand.u32 %s63, 1
          %s472 = sand.u32 %s63, 1
          %s473 = smul.addr %s472, 48
          %s474 = scalar_lea.vmem [#allocation3], %s473
          %s475 = smul.u32 2, %s27
          %s476 = smul.addr %s475, 4
          %s477 = scalar_lea.vmem %s1, %s476
          // Predicated region
          $region103: #{tpu_custom_call.1} parent=101 // pred_check
            _
          $region104: #{tpu_custom_call.1} parent=101 // pred_check_branch
            %479 = sbr.rel (0) target = $region106
          $region105: #{tpu_custom_call.1} parent=101 // pred_region
            // Predicated region
            $region107: #{tpu_custom_call.1} parent=105 // pred_check
              _
            $region108: #{tpu_custom_call.1} parent=105 // pred_check_branch
              %481 = sbr.rel (0) target = $region110
            $region109: #{tpu_custom_call.1} parent=105 // pred_region
              // Predicated region
              $region122: #{tpu_custom_call.1} parent=109 // pred_check
                _
              $region123: #{tpu_custom_call.1} parent=109 // pred_check_branch
                %506 = sbr.rel (0) target = $region125
              $region124: #{tpu_custom_call.1} parent=109 // pred_region
                loop: start=0, step=1, limit=1
                $region126: #{tpu_custom_call.1} parent=124 // loop_pre_header
                  _
                $region127: #{tpu_custom_call.1} parent=124 // loop_header
                  %s508 = sphi 0, %s512
                  %p509 = scmp.ge.s32.totalorder %s508, 1
                  %s513 = sphi %s477, %s477
                  %s514 = sphi %s474, %s474
                $region128: #{tpu_custom_call.1} parent=124 // loop_header_branch
                  %511 = sbr.rel (%p509) target = $region132
                $region129: #{tpu_custom_call.1} parent=124 // loop_body
                  %v515 = vld [vmem:[%s513] sm:$0xff]
                  %516 = vst [vmem:[%s514] sm:$0xff] %v515
                  %v517 = vld [vmem:[%s513 + $0x10] sm:$0xff]
                  %518 = vst [vmem:[%s514 + $0x8] sm:$0xff] %v517
                  %v519 = vld [vmem:[%s513 + $0x20] sm:$0xff]
                  %520 = vst [vmem:[%s514 + $0x10] sm:$0xff] %v519
                  %v521 = vld [vmem:[%s513 + $0x30] sm:$0xff]
                  %522 = vst [vmem:[%s514 + $0x18] sm:$0xff] %v521
                  %v523 = vld [vmem:[%s513 + $0x40] sm:$0xff]
                  %524 = vst [vmem:[%s514 + $0x20] sm:$0xff] %v523
                  %v525 = vld [vmem:[%s513 + $0x50] sm:$0xff]
                  %526 = vst [vmem:[%s514 + $0x28] sm:$0xff] %v525
                $region130: #{tpu_custom_call.1} parent=124 // loop_footer
                  %s512 = sadd.s32 1, %s508
                $region131: #{tpu_custom_call.1} parent=124 // loop_footer_branch
                  %507 = sbr.rel target = $region127
                $region132: #{tpu_custom_call.1} parent=124 // loop_exit
                  _
              $region125: #{tpu_custom_call.1} parent=109 // pred_fallthru
                _
              // Predicated region
              $region133: #{tpu_custom_call.1} parent=109 // pred_check
                _
              $region134: #{tpu_custom_call.1} parent=109 // pred_check_branch
                %528 = sbr.rel target = $region136
              $region135: #{tpu_custom_call.1} parent=109 // pred_region
                _
              $region136: #{tpu_custom_call.1} parent=109 // pred_fallthru
                _
            $region110: #{tpu_custom_call.1} parent=105 // pred_fallthru
              _
            // Predicated region
            $region111: #{tpu_custom_call.1} parent=105 // pred_check
              _
            $region112: #{tpu_custom_call.1} parent=105 // pred_check_branch
              %483 = sbr.rel target = $region114
            $region113: #{tpu_custom_call.1} parent=105 // pred_region
              loop: start=0, step=1, limit=1
              $region115: #{tpu_custom_call.1} parent=113 // loop_pre_header
                _
              $region116: #{tpu_custom_call.1} parent=113 // loop_header
                %s486 = sphi 0, %s490
                %p487 = scmp.ge.s32.totalorder %s486, 1
                %s491 = sphi %s477, %s477
                %s492 = sphi %s474, %s474
              $region117: #{tpu_custom_call.1} parent=113 // loop_header_branch
                %489 = sbr.rel (%p487) target = $region121
              $region118: #{tpu_custom_call.1} parent=113 // loop_body
                %v493 = vld [vmem:[%s491] sm:$0xff]
                %494 = vst [vmem:[%s492] sm:$0xff] %v493
                %v495 = vld [vmem:[%s491 + $0x10] sm:$0xff]
                %496 = vst [vmem:[%s492 + $0x8] sm:$0xff] %v495
                %v497 = vld [vmem:[%s491 + $0x20] sm:$0xff]
                %498 = vst [vmem:[%s492 + $0x10] sm:$0xff] %v497
                %v499 = vld [vmem:[%s491 + $0x30] sm:$0xff]
                %500 = vst [vmem:[%s492 + $0x18] sm:$0xff] %v499
                %v501 = vld [vmem:[%s491 + $0x40] sm:$0xff]
                %502 = vst [vmem:[%s492 + $0x20] sm:$0xff] %v501
                %v503 = vld [vmem:[%s491 + $0x50] sm:$0xff]
                %504 = vst [vmem:[%s492 + $0x28] sm:$0xff] %v503
              $region119: #{tpu_custom_call.1} parent=113 // loop_footer
                %s490 = sadd.s32 1, %s486
              $region120: #{tpu_custom_call.1} parent=113 // loop_footer_branch
                %485 = sbr.rel target = $region116
              $region121: #{tpu_custom_call.1} parent=113 // loop_exit
                _
            $region114: #{tpu_custom_call.1} parent=105 // pred_fallthru
              _
          $region106: #{tpu_custom_call.1} parent=101 // pred_fallthru
            _
          %529 = vnop
        $region102: #{tpu_custom_call.1} parent=59 // pred_fallthru
          _
      $region60: #{tpu_custom_call.1} parent=5 // pred_fallthru
        _
      %p530 = scmp.le.s32.totalorder 1, %s27
      %p531 = scmp.lt.s32.totalorder %s27, 3
      %p532 = pnand %p530, %p531
      %p533 = pneg %p532
      // Predicated region
      $region137: #{tpu_custom_call.1} parent=5 // pred_check
        _
      $region138: #{tpu_custom_call.1} parent=5 // pred_check_branch
        %535 = sbr.rel (%p532) target = $region140
      $region139: #{tpu_custom_call.1} parent=5 // pred_region
        %s536 = ssub.s32 %s27, 1
        %s537 = sand.u32 %s40, 1
        %s538 = sand.u32 %s40, 1
        %s539 = smul.addr %s538, 32
        %s540 = scalar_lea.vmem [#allocation2], %s539
        // Predicated region
        $region141: #{tpu_custom_call.1} parent=139 // pred_check
          %p541 = pneg %p53
        $region142: #{tpu_custom_call.1} parent=139 // pred_check_branch
          %543 = sbr.rel (%p541) target = $region144
        $region143: #{tpu_custom_call.1} parent=139 // pred_region
          _
        $region144: #{tpu_custom_call.1} parent=139 // pred_fallthru
          _
        %s544 = sand.u32 %s66, 1
        %s545 = sand.u32 %s66, 1
        %s546 = smul.addr %s545, 48
        %s547 = scalar_lea.vmem [#allocation3], %s546
        // Predicated region
        $region145: #{tpu_custom_call.1} parent=139 // pred_check
          %p548 = pneg %p79
        $region146: #{tpu_custom_call.1} parent=139 // pred_check_branch
          %550 = sbr.rel (%p548) target = $region148
        $region147: #{tpu_custom_call.1} parent=139 // pred_region
          _
        $region148: #{tpu_custom_call.1} parent=139 // pred_fallthru
          _
        %s551 = sand.u32 %s40, 1
        %s552 = sand.u32 %s40, 1
        %s553 = smul.addr %s552, 32
        %s554 = scalar_lea.vmem [#allocation2], %s553
        %p555 = pneg %p53
        %p556 = pneg %p50
        %s557 = sand.u32 %s66, 1
        %s558 = sand.u32 %s66, 1
        %s559 = smul.addr %s558, 48
        %s560 = scalar_lea.vmem [#allocation3], %s559
        %p561 = pneg %p79
        %p562 = pneg %p76
        %p563 = pneg %p100
        %p564 = pneg %p97
        %p565 = pneg %p121
        %p566 = pneg %p118
        %p567 = pneg %p142
        %p568 = pneg %p139
        %p569 = pneg %p163
        %p570 = pneg %p160
        %p571 = pneg %p184
        %p572 = pneg %p181
        %p573 = pneg %p205
        %p574 = pneg %p202
        %p575 = pneg %p226
        %p576 = pneg %p223
        %p577 = pneg %p247
        %p578 = pneg %p244
        %p579 = pneg %p268
        %p580 = pneg %p265
        %p581 = pneg %p289
        %p582 = pneg %p286
        %p583 = pneg %p310
        %p584 = pneg %p307
        %p585 = pneg %p336
        %p586 = pneg %p333
        %s587 = sand.u32 %s323, 1
        %s588 = scalar_lea.sflag [#allocation5], %s587
        %s589 = sand.u32 %s323, 1
        %s590 = smul.addr %s589, 32
        %s591 = scalar_lea.vmem [#allocation4], %s590
        %p592 = pneg %p362
        %p593 = pneg %p359
        %s594 = sand.u32 %s349, 1
        %s595 = scalar_lea.sflag [#allocation7], %s594
        %s596 = sand.u32 %s349, 1
        %s597 = smul.addr %s596, 48
        %s598 = scalar_lea.vmem [#allocation6], %s597
        %s599 = smul.u32 2, %s32
        %s600 = smul.u32 2, %s32
        %s601 = smul.u32 2, %s32
        %s602 = smul.u32 2, %s32
        %v603 = vld [vmem:[%s540] sm:$0xff]
        %v604 = vld [vmem:[%s540 + $0x8] sm:$0xff]
        %v605 = vld [vmem:[%s540 + $0x10] sm:$0xff]
        %v606 = vld [vmem:[%s540 + $0x18] sm:$0xff]
        %v607 = vunpack.c.l.bf16 %v603
        %v608 = vunpack.c.h.bf16 %v603
        %v609 = vunpack.c.l.bf16 %v604
        %v610 = vunpack.c.h.bf16 %v604
        %v611 = vunpack.c.l.bf16 %v605
        %v612 = vunpack.c.h.bf16 %v605
        %v613 = vunpack.c.l.bf16 %v606
        %v614 = vunpack.c.h.bf16 %v606
        %v615 = vld [vmem:[%s547] sm:$0xff]
        %v616 = vld [vmem:[%s547 + $0x8] sm:$0xff]
        %v617 = vld [vmem:[%s547 + $0x10] sm:$0xff]
        %v618 = vld [vmem:[%s547 + $0x18] sm:$0xff]
        %v619 = vld [vmem:[%s547 + $0x20] sm:$0xff]
        %v620 = vld [vmem:[%s547 + $0x28] sm:$0xff]
        %v621 = vunpack.c.l.bf16 %v615
        %v622 = vunpack.c.h.bf16 %v615
        %v623 = vunpack.c.l.bf16 %v616
        %v624 = vunpack.c.h.bf16 %v616
        %v625 = vunpack.c.l.bf16 %v617
        %v626 = vunpack.c.h.bf16 %v617
        %v627 = vunpack.c.l.bf16 %v618
        %v628 = vunpack.c.h.bf16 %v618
        %v629 = vunpack.c.l.bf16 %v619
        %v630 = vunpack.c.h.bf16 %v619
        %v631 = vunpack.c.l.bf16 %v620
        %v632 = vunpack.c.h.bf16 %v620
        %v633 = vld [vmem:[%s12] sm:$0xff]
        %v634 = vld [vmem:[%s12 + $0x8] sm:$0xff]
        %v635 = vld [vmem:[%s12 + $0x10] sm:$0xff]
        %v636 = vld [vmem:[%s12 + $0x18] sm:$0xff]
        %v637 = vld [vmem:[%s12 + $0x20] sm:$0xff]
        %v638 = vld [vmem:[%s12 + $0x28] sm:$0xff]
        %v639 = vld [vmem:[%s12 + $0x30] sm:$0xff]
        %v640 = vld [vmem:[%s12 + $0x38] sm:$0xff]
        %v641 = vld [vmem:[%s12 + $0x40] sm:$0xff]
        %v642 = vld [vmem:[%s12 + $0x48] sm:$0xff]
        %v643 = vld [vmem:[%s12 + $0x50] sm:$0xff]
        %v644 = vld [vmem:[%s12 + $0x58] sm:$0xff]
        %v645 = vld [vmem:[%s12 + $0x60] sm:$0xff]
        %v646 = vld [vmem:[%s12 + $0x68] sm:$0xff]
        %v647 = vld [vmem:[%s12 + $0x70] sm:$0xff]
        %v648 = vld [vmem:[%s12 + $0x78] sm:$0xff]
        %v649 = vld [vmem:[%s12 + $0x80] sm:$0xff]
        %v650 = vld [vmem:[%s12 + $0x88] sm:$0xff]
        %v651 = vld [vmem:[%s12 + $0x90] sm:$0xff]
        %v652 = vld [vmem:[%s12 + $0x98] sm:$0xff]
        %v653 = vld [vmem:[%s12 + $0xa0] sm:$0xff]
        %v654 = vld [vmem:[%s12 + $0xa8] sm:$0xff]
        %v655 = vld [vmem:[%s12 + $0xb0] sm:$0xff]
        %v656 = vld [vmem:[%s2] sm:$0xff]
        %v657 = vld [vmem:[%s2 + $0x8] sm:$0xff]
        %v658 = vld [vmem:[%s2 + $0x10] sm:$0xff]
        %v659 = vld [vmem:[%s2 + $0x18] sm:$0xff]
        %v660 = vld [vmem:[%s2 + $0x20] sm:$0xff]
        %662 = vset.pattern.permute.xlu0 0
        %663 = vperm.xlu0 %662, %v633
        %v664 = vpop.permute.xlu0 %663
        %667 = vset.pattern.permute.xlu0 0
        %668 = vperm.xlu0 %667, %v634
        %v669 = vpop.permute.xlu0 %668
        %672 = vset.pattern.permute.xlu0 0
        %673 = vperm.xlu0 %672, %v635
        %v674 = vpop.permute.xlu0 %673
        %677 = vset.pattern.permute.xlu0 0
        %678 = vperm.xlu0 %677, %v636
        %v679 = vpop.permute.xlu0 %678
        %682 = vset.pattern.permute.xlu0 0
        %683 = vperm.xlu0 %682, %v637
        %v684 = vpop.permute.xlu0 %683
        %vm686 = vcmask 261120
        %v688 = vsel %vm686, %v656, 0
        %v691 = vsel %vm686, %v657, 0
        %v694 = vsel %vm686, %v658, 0
        %v697 = vsel %vm686, %v659, 0
        %v700 = vsel %vm686, %v660, 0
        %702 = vmatprep.subr.mxu0 %v608
        %703 = vmatpush1.msra.mxu0 %v607
        %704 = vmatprep.subr.mxu0 %v610
        %705 = vmatpush1.msra.mxu0 %v609
        %706 = vmatprep.subr.mxu0 %v612
        %707 = vmatpush1.msra.mxu0 %v611
        %708 = vmatprep.subr.mxu0 %v614
        %709 = vmatpush1.msra.mxu0 %v613
        %710 = vmatprep.subr.mxu0 0.0
        %711 = vmatpush1.msra.mxu0 0.0
        %712 = vmatprep.subr.mxu0 0.0
        %713 = vmatpush1.msra.mxu0 0.0
        %714 = vmatprep.subr.mxu0 0.0
        %715 = vmatpush1.msra.mxu0 0.0
        %716 = vmatprep.subr.mxu0 0.0
        %717 = vmatpush1.msra.mxu0 0.0
        %718 = vmatprep.subr.mxu0 0.0
        %719 = vmatpush1.msra.mxu0 0.0
        %720 = vmatprep.subr.mxu0 0.0
        %721 = vmatpush1.msra.mxu0 0.0
        %722 = vmatprep.subr.mxu0 0.0
        %723 = vmatpush1.msra.mxu0 0.0
        %724 = vmatprep.subr.mxu0 0.0
        %725 = vmatpush1.msra.mxu0 0.0
        %726 = vmatprep.subr.mxu0 0.0
        %727 = vmatpush1.msra.mxu0 0.0
        %728 = vmatprep.subr.mxu0 0.0
        %729 = vmatpush1.msra.mxu0 0.0
        %730 = vmatprep.subr.mxu0 0.0
        %731 = vmatpush1.msra.mxu0 0.0
        %732 = vmatprep.subr.mxu0 0.0
        %733 = vmatpush1.msra.mxu0 0.0
        %734 = vmatprep.subr.mxu0 0.0
        %735 = vmatpush1.msra.mxu0 0.0
        %736 = vmatprep.subr.mxu0 0.0
        %737 = vmatpush1.msra.mxu0 0.0
        %738 = vmatprep.subr.mxu0 0.0
        %739 = vmatpush1.msra.mxu0 0.0
        %740 = vmatprep.subr.mxu0 0.0
        %741 = vmatpush1.msra.mxu0 0.0
        %742 = vmatprep.subr.mxu0 0.0
        %743 = vmatpush1.msra.mxu0 0.0
        %744 = vmatprep.subr.mxu0 0.0
        %745 = vmatpush1.msra.mxu0 0.0
        %746 = vmatprep.subr.mxu0 0.0
        %747 = vmatpush1.msra.mxu0 0.0
        %748 = vmatprep.subr.mxu0 0.0
        %749 = vmatpush1.msra.mxu0 0.0
        %750 = vmatprep.subr.mxu0 0.0
        %751 = vmatpush1.msra.mxu0 0.0
        %752 = vmatprep.subr.mxu0 0.0
        %753 = vmatpush1.msra.mxu0 0.0
        %754 = vmatprep.subr.mxu0 0.0
        %755 = vmatpush1.msra.mxu0 0.0
        %756 = vmatprep.subr.mxu0 0.0
        %757 = vmatpush1.msra.mxu0 0.0
        %758 = vmatprep.subr.mxu0 0.0
        %759 = vmatpush1.msra.mxu0 0.0
        %760 = vmatprep.subr.mxu0 0.0
        %761 = vmatpush1.msra.mxu0 0.0
        %762 = vmatprep.subr.mxu0 0.0
        %763 = vmatpush1.msra.mxu0 0.0
        %764 = vmatprep.subr.mxu0 0.0
        %765 = vmatpush1.msra.mxu0 0.0
        %766 = vmatprep.mubr.f32.mxu0 0.0
        %767 = vmatmul.mubr.f32.gmra.mrb[0].mxu0 %v688
        %v768 = vpop.f32.mrb[0].mxu0
        %v769 = vadd.f32 %v664, %v768
        %v770 = vpop.f32.mrb[0].mxu0
        %v771 = vadd.f32 %v664, %v770
        %772 = vmatprep.mubr.f32.mxu0 0.0
        %773 = vmatmul.mubr.f32.gmra.mrb[0].mxu0 %v691
        %v774 = vpop.f32.mrb[0].mxu0
        %v775 = vadd.f32 %v669, %v774
        %v776 = vpop.f32.mrb[0].mxu0
        %v777 = vadd.f32 %v669, %v776
        %778 = vmatprep.mubr.f32.mxu0 0.0
        %779 = vmatmul.mubr.f32.gmra.mrb[0].mxu0 %v694
        %v780 = vpop.f32.mrb[0].mxu0
        %v781 = vadd.f32 %v674, %v780
        %v782 = vpop.f32.mrb[0].mxu0
        %v783 = vadd.f32 %v674, %v782
        %784 = vmatprep.mubr.f32.mxu0 0.0
        %785 = vmatmul.mubr.f32.gmra.mrb[0].mxu0 %v697
        %v786 = vpop.f32.mrb[0].mxu0
        %v787 = vadd.f32 %v679, %v786
        %v788 = vpop.f32.mrb[0].mxu0
        %v789 = vadd.f32 %v679, %v788
        %790 = vmatprep.mubr.f32.mxu0 0.0
        %791 = vmatmul.mubr.f32.gmra.mrb[0].mxu0 %v700
        %v792 = vpop.f32.mrb[0].mxu0
        %v793 = vadd.f32 %v684, %v792
        %v794 = vpop.f32.mrb[0].mxu0
        %v795 = vadd.f32 %v684, %v794
        %796 = vdwg.mxu0
        %v797 = vmul.f32 %v769, 0.2
        %v798 = vmul.f32 %v771, 0.2
        %v799 = vmul.f32 %v775, 0.2
        %v800 = vmul.f32 %v777, 0.2
        %v801 = vmul.f32 %v781, 0.2
        %v802 = vmul.f32 %v783, 0.2
        %v803 = vmul.f32 %v787, 0.2
        %v804 = vmul.f32 %v789, 0.2
        %v805 = vmax.f32 %v769, %v797
        %v806 = vmax.f32 %v771, %v798
        %v807 = vmax.f32 %v775, %v799
        %v808 = vmax.f32 %v777, %v800
        %v809 = vmax.f32 %v781, %v801
        %v810 = vmax.f32 %v783, %v802
        %v811 = vmax.f32 %v787, %v803
        %v812 = vmax.f32 %v789, %v804
        %v813 = vld [vmem:[%s3] sm:$0xff]
        %v814 = vld [vmem:[%s3 + $0x8] sm:$0xff]
        %v815 = vld [vmem:[%s3 + $0x10] sm:$0xff]
        %v816 = vld [vmem:[%s3 + $0x18] sm:$0xff]
        %818 = vset.pattern.permute.xlu0 0
        %819 = vperm.xlu0 %818, %v638
        %v820 = vpop.permute.xlu0 %819
        %823 = vset.pattern.permute.xlu0 0
        %824 = vperm.xlu0 %823, %v639
        %v825 = vpop.permute.xlu0 %824
        %828 = vset.pattern.permute.xlu0 0
        %829 = vperm.xlu0 %828, %v640
        %v830 = vpop.permute.xlu0 %829
        %833 = vset.pattern.permute.xlu0 0
        %834 = vperm.xlu0 %833, %v641
        %v835 = vpop.permute.xlu0 %834
        %v838 = vsel %vm686, %v813, 0
        %v841 = vsel %vm686, %v814, 0
        %v844 = vsel %vm686, %v815, 0
        %v847 = vsel %vm686, %v816, 0
        %849 = vmatprep.subr.mxu0 %v806
        %850 = vmatpush1.msra.mxu0 %v805
        %851 = vmatprep.subr.mxu0 %v808
        %852 = vmatpush1.msra.mxu0 %v807
        %853 = vmatprep.subr.mxu0 %v810
        %854 = vmatpush1.msra.mxu0 %v809
        %855 = vmatprep.subr.mxu0 %v812
        %856 = vmatpush1.msra.mxu0 %v811
        %857 = vmatprep.subr.mxu0 0.0
        %858 = vmatpush1.msra.mxu0 0.0
        %859 = vmatprep.subr.mxu0 0.0
        %860 = vmatpush1.msra.mxu0 0.0
        %861 = vmatprep.subr.mxu0 0.0
        %862 = vmatpush1.msra.mxu0 0.0
        %863 = vmatprep.subr.mxu0 0.0
        %864 = vmatpush1.msra.mxu0 0.0
        %865 = vmatprep.subr.mxu0 0.0
        %866 = vmatpush1.msra.mxu0 0.0
        %867 = vmatprep.subr.mxu0 0.0
        %868 = vmatpush1.msra.mxu0 0.0
        %869 = vmatprep.subr.mxu0 0.0
        %870 = vmatpush1.msra.mxu0 0.0
        %871 = vmatprep.subr.mxu0 0.0
        %872 = vmatpush1.msra.mxu0 0.0
        %873 = vmatprep.subr.mxu0 0.0
        %874 = vmatpush1.msra.mxu0 0.0
        %875 = vmatprep.subr.mxu0 0.0
        %876 = vmatpush1.msra.mxu0 0.0
        %877 = vmatprep.subr.mxu0 0.0
        %878 = vmatpush1.msra.mxu0 0.0
        %879 = vmatprep.subr.mxu0 0.0
        %880 = vmatpush1.msra.mxu0 0.0
        %881 = vmatprep.subr.mxu0 0.0
        %882 = vmatpush1.msra.mxu0 0.0
        %883 = vmatprep.subr.mxu0 0.0
        %884 = vmatpush1.msra.mxu0 0.0
        %885 = vmatprep.subr.mxu0 0.0
        %886 = vmatpush1.msra.mxu0 0.0
        %887 = vmatprep.subr.mxu0 0.0
        %888 = vmatpush1.msra.mxu0 0.0
        %889 = vmatprep.subr.mxu0 0.0
        %890 = vmatpush1.msra.mxu0 0.0
        %891 = vmatprep.subr.mxu0 0.0
        %892 = vmatpush1.msra.mxu0 0.0
        %893 = vmatprep.subr.mxu0 0.0
        %894 = vmatpush1.msra.mxu0 0.0
        %895 = vmatprep.subr.mxu0 0.0
        %896 = vmatpush1.msra.mxu0 0.0
        %897 = vmatprep.subr.mxu0 0.0
        %898 = vmatpush1.msra.mxu0 0.0
        %899 = vmatprep.subr.mxu0 0.0
        %900 = vmatpush1.msra.mxu0 0.0
        %901 = vmatprep.subr.mxu0 0.0
        %902 = vmatpush1.msra.mxu0 0.0
        %903 = vmatprep.subr.mxu0 0.0
        %904 = vmatpush1.msra.mxu0 0.0
        %905 = vmatprep.subr.mxu0 0.0
        %906 = vmatpush1.msra.mxu0 0.0
        %907 = vmatprep.subr.mxu0 0.0
        %908 = vmatpush1.msra.mxu0 0.0
        %909 = vmatprep.subr.mxu0 0.0
        %910 = vmatpush1.msra.mxu0 0.0
        %911 = vmatprep.subr.mxu0 0.0
        %912 = vmatpush1.msra.mxu0 0.0
        %913 = vmatprep.mubr.f32.mxu0 0.0
        %914 = vmatmul.mubr.f32.gmra.mrb[0].mxu0 %v838
        %v915 = vpop.f32.mrb[0].mxu0
        %v916 = vadd.f32 %v820, %v915
        %v917 = vpop.f32.mrb[0].mxu0
        %v918 = vadd.f32 %v820, %v917
        %919 = vmatprep.mubr.f32.mxu0 0.0
        %920 = vmatmul.mubr.f32.gmra.mrb[0].mxu0 %v841
        %v921 = vpop.f32.mrb[0].mxu0
        %v922 = vadd.f32 %v825, %v921
        %v923 = vpop.f32.mrb[0].mxu0
        %v924 = vadd.f32 %v825, %v923
        %925 = vmatprep.mubr.f32.mxu0 0.0
        %926 = vmatmul.mubr.f32.gmra.mrb[0].mxu0 %v844
        %v927 = vpop.f32.mrb[0].mxu0
        %v928 = vadd.f32 %v830, %v927
        %v929 = vpop.f32.mrb[0].mxu0
        %v930 = vadd.f32 %v830, %v929
        %931 = vmatprep.mubr.f32.mxu0 0.0
        %932 = vmatmul.mubr.f32.gmra.mrb[0].mxu0 %v847
        %v933 = vpop.f32.mrb[0].mxu0
        %v934 = vadd.f32 %v835, %v933
        %v935 = vpop.f32.mrb[0].mxu0
        %v936 = vadd.f32 %v835, %v935
        %937 = vdwg.mxu0
        %v938 = vmul.f32 %v916, 0.2
        %v939 = vmul.f32 %v918, 0.2
        %v940 = vmul.f32 %v922, 0.2
        %v941 = vmul.f32 %v924, 0.2
        %v942 = vmul.f32 %v928, 0.2
        %v943 = vmul.f32 %v930, 0.2
        %v944 = vmul.f32 %v934, 0.2
        %v945 = vmul.f32 %v936, 0.2
        %v946 = vmax.f32 %v916, %v938
        %v947 = vmax.f32 %v918, %v939
        %v948 = vmax.f32 %v922, %v940
        %v949 = vmax.f32 %v924, %v941
        %v950 = vmax.f32 %v928, %v942
        %v951 = vmax.f32 %v930, %v943
        %v952 = vmax.f32 %v934, %v944
        %v953 = vmax.f32 %v936, %v945
        %v954 = vld [vmem:[%s6] sm:$0xff]
        %v955 = vld [vmem:[%s6 + $0x8] sm:$0xff]
        %v956 = vld [vmem:[%s6 + $0x10] sm:$0xff]
        %v957 = vld [vmem:[%s6 + $0x18] sm:$0xff]
        %v958 = vld [vmem:[%s6 + $0x20] sm:$0xff]
        %v959 = vld [vmem:[%s6 + $0x28] sm:$0xff]
        %v960 = vld [vmem:[%s6 + $0x30] sm:$0xff]
        %v961 = vld [vmem:[%s6 + $0x38] sm:$0xff]
        %v962 = vld [vmem:[%s6 + $0x40] sm:$0xff]
        %v963 = vld [vmem:[%s6 + $0x48] sm:$0xff]
        %v964 = vld [vmem:[%s6 + $0x50] sm:$0xff]
        %v965 = vld [vmem:[%s6 + $0x58] sm:$0xff]
        %vm966 = vcmask 392192
        %v968 = vsel %vm966, %v954, 0
        %v971 = vsel %vm966, %v955, 0
        %v974 = vsel %vm966, %v956, 0
        %v977 = vsel %vm966, %v957, 0
        %v980 = vsel %vm966, %v958, 0
        %v983 = vsel %vm966, %v959, 0
        %v986 = vsel %vm966, %v960, 0
        %v989 = vsel %vm966, %v961, 0
        %v992 = vsel %vm966, %v962, 0
        %v995 = vsel %vm966, %v963, 0
        %v998 = vsel %vm966, %v964, 0
        %v1001 = vsel %vm966, %v965, 0
        %1003 = vmatprep.subr.mxu0 %v622
        %1004 = vmatpush1.msra.mxu0 %v621
        %1005 = vmatprep.subr.mxu0 %v624
        %1006 = vmatpush1.msra.mxu0 %v623
        %1007 = vmatprep.subr.mxu0 %v626
        %1008 = vmatpush1.msra.mxu0 %v625
        %1009 = vmatprep.subr.mxu0 %v628
        %1010 = vmatpush1.msra.mxu0 %v627
        %1011 = vmatprep.subr.mxu0 %v630
        %1012 = vmatpush1.msra.mxu0 %v629
        %1013 = vmatprep.subr.mxu0 %v632
        %1014 = vmatpush1.msra.mxu0 %v631
        %1015 = vmatprep.subr.mxu0 0.0
        %1016 = vmatpush1.msra.mxu0 0.0
        %1017 = vmatprep.subr.mxu0 0.0
        %1018 = vmatpush1.msra.mxu0 0.0
        %1019 = vmatprep.subr.mxu0 0.0
        %1020 = vmatpush1.msra.mxu0 0.0
        %1021 = vmatprep.subr.mxu0 0.0
        %1022 = vmatpush1.msra.mxu0 0.0
        %1023 = vmatprep.subr.mxu0 0.0
        %1024 = vmatpush1.msra.mxu0 0.0
        %1025 = vmatprep.subr.mxu0 0.0
        %1026 = vmatpush1.msra.mxu0 0.0
        %1027 = vmatprep.subr.mxu0 0.0
        %1028 = vmatpush1.msra.mxu0 0.0
        %1029 = vmatprep.subr.mxu0 0.0
        %1030 = vmatpush1.msra.mxu0 0.0
        %1031 = vmatprep.subr.mxu0 0.0
        %1032 = vmatpush1.msra.mxu0 0.0
        %1033 = vmatprep.subr.mxu0 0.0
        %1034 = vmatpush1.msra.mxu0 0.0
        %1035 = vmatprep.subr.mxu0 0.0
        %1036 = vmatpush1.msra.mxu0 0.0
        %1037 = vmatprep.subr.mxu0 0.0
        %1038 = vmatpush1.msra.mxu0 0.0
        %1039 = vmatprep.subr.mxu0 0.0
        %1040 = vmatpush1.msra.mxu0 0.0
        %1041 = vmatprep.subr.mxu0 0.0
        %1042 = vmatpush1.msra.mxu0 0.0
        %1043 = vmatprep.subr.mxu0 0.0
        %1044 = vmatpush1.msra.mxu0 0.0
        %1045 = vmatprep.subr.mxu0 0.0
        %1046 = vmatpush1.msra.mxu0 0.0
        %1047 = vmatprep.subr.mxu0 0.0
        %1048 = vmatpush1.msra.mxu0 0.0
        %1049 = vmatprep.subr.mxu0 0.0
        %1050 = vmatpush1.msra.mxu0 0.0
        %1051 = vmatprep.subr.mxu0 0.0
        %1052 = vmatpush1.msra.mxu0 0.0
        %1053 = vmatprep.subr.mxu0 0.0
        %1054 = vmatpush1.msra.mxu0 0.0
        %1055 = vmatprep.subr.mxu0 0.0
        %1056 = vmatpush1.msra.mxu0 0.0
        %1057 = vmatprep.subr.mxu0 0.0
        %1058 = vmatpush1.msra.mxu0 0.0
        %1059 = vmatprep.subr.mxu0 0.0
        %1060 = vmatpush1.msra.mxu0 0.0
        %1061 = vmatprep.subr.mxu0 0.0
        %1062 = vmatpush1.msra.mxu0 0.0
        %1063 = vmatprep.subr.mxu0 0.0
        %1064 = vmatpush1.msra.mxu0 0.0
        %1065 = vmatprep.subr.mxu0 0.0
        %1066 = vmatpush1.msra.mxu0 0.0
        %1067 = vmatprep.mubr.f32.mxu0 0.0
        %1068 = vmatmul.mubr.f32.gmra.mrb[0].mxu0 %v968
        %v1069 = vpop.f32.mrb[0].mxu0
        %v1070 = vadd.f32 0.0, %v1069
        %v1071 = vpop.f32.mrb[0].mxu0
        %v1072 = vadd.f32 0.0, %v1071
        %1073 = vmatprep.mubr.f32.mxu0 0.0
        %1074 = vmatmul.mubr.f32.gmra.mrb[0].mxu0 %v971
        %v1075 = vpop.f32.mrb[0].mxu0
        %v1076 = vadd.f32 0.0, %v1075
        %v1077 = vpop.f32.mrb[0].mxu0
        %v1078 = vadd.f32 0.0, %v1077
        %1079 = vmatprep.mubr.f32.mxu0 0.0
        %1080 = vmatmul.mubr.f32.gmra.mrb[0].mxu0 %v974
        %v1081 = vpop.f32.mrb[0].mxu0
        %v1082 = vadd.f32 0.0, %v1081
        %v1083 = vpop.f32.mrb[0].mxu0
        %v1084 = vadd.f32 0.0, %v1083
        %1085 = vmatprep.mubr.f32.mxu0 0.0
        %1086 = vmatmul.mubr.f32.gmra.mrb[0].mxu0 %v977
        %v1087 = vpop.f32.mrb[0].mxu0
        %v1088 = vadd.f32 0.0, %v1087
        %v1089 = vpop.f32.mrb[0].mxu0
        %v1090 = vadd.f32 0.0, %v1089
        %1091 = vmatprep.mubr.f32.mxu0 0.0
        %1092 = vmatmul.mubr.f32.gmra.mrb[0].mxu0 %v980
        %v1093 = vpop.f32.mrb[0].mxu0
        %v1094 = vadd.f32 0.0, %v1093
        %v1095 = vpop.f32.mrb[0].mxu0
        %v1096 = vadd.f32 0.0, %v1095
        %1097 = vmatprep.mubr.f32.mxu0 0.0
        %1098 = vmatmul.mubr.f32.gmra.mrb[0].mxu0 %v983
        %v1099 = vpop.f32.mrb[0].mxu0
        %v1100 = vadd.f32 0.0, %v1099
        %v1101 = vpop.f32.mrb[0].mxu0
        %v1102 = vadd.f32 0.0, %v1101
        %1103 = vmatprep.mubr.f32.mxu0 0.0
        %1104 = vmatmul.mubr.f32.gmra.mrb[0].mxu0 %v986
        %v1105 = vpop.f32.mrb[0].mxu0
        %v1106 = vadd.f32 0.0, %v1105
        %v1107 = vpop.f32.mrb[0].mxu0
        %v1108 = vadd.f32 0.0, %v1107
        %1109 = vmatprep.mubr.f32.mxu0 0.0
        %1110 = vmatmul.mubr.f32.gmra.mrb[0].mxu0 %v989
        %v1111 = vpop.f32.mrb[0].mxu0
        %v1112 = vadd.f32 0.0, %v1111
        %v1113 = vpop.f32.mrb[0].mxu0
        %v1114 = vadd.f32 0.0, %v1113
        %1115 = vmatprep.mubr.f32.mxu0 0.0
        %1116 = vmatmul.mubr.f32.gmra.mrb[0].mxu0 %v992
        %v1117 = vpop.f32.mrb[0].mxu0
        %v1118 = vadd.f32 0.0, %v1117
        %v1119 = vpop.f32.mrb[0].mxu0
        %v1120 = vadd.f32 0.0, %v1119
        %1121 = vmatprep.mubr.f32.mxu0 0.0
        %1122 = vmatmul.mubr.f32.gmra.mrb[0].mxu0 %v995
        %v1123 = vpop.f32.mrb[0].mxu0
        %v1124 = vadd.f32 0.0, %v1123
        %v1125 = vpop.f32.mrb[0].mxu0
        %v1126 = vadd.f32 0.0, %v1125
        %1127 = vmatprep.mubr.f32.mxu0 0.0
        %1128 = vmatmul.mubr.f32.gmra.mrb[0].mxu0 %v998
        %v1129 = vpop.f32.mrb[0].mxu0
        %v1130 = vadd.f32 0.0, %v1129
        %v1131 = vpop.f32.mrb[0].mxu0
        %v1132 = vadd.f32 0.0, %v1131
        %1133 = vmatprep.mubr.f32.mxu0 0.0
        %1134 = vmatmul.mubr.f32.gmra.mrb[0].mxu0 %v1001
        %v1135 = vpop.f32.mrb[0].mxu0
        %v1136 = vadd.f32 0.0, %v1135
        %v1137 = vpop.f32.mrb[0].mxu0
        %v1138 = vadd.f32 0.0, %v1137
        %1139 = vdwg.mxu0
        %v1140 = vmul.f32 %v1070, %v1070
        %v1141 = vmul.f32 %v1072, %v1072
        %v1142 = vmul.f32 %v1076, %v1076
        %v1143 = vmul.f32 %v1078, %v1078
        %v1144 = vmul.f32 %v1082, %v1082
        %v1145 = vmul.f32 %v1084, %v1084
        %v1146 = vmul.f32 %v1088, %v1088
        %v1147 = vmul.f32 %v1090, %v1090
        %v1148 = vadd.f32 %v1140, %v1144
        %v1149 = vadd.f32 %v1141, %v1145
        %v1150 = vadd.f32 %v1142, %v1146
        %v1151 = vadd.f32 %v1143, %v1147
        %v1152 = vmul.f32 %v1094, %v1094
        %v1153 = vmul.f32 %v1096, %v1096
        %v1154 = vmul.f32 %v1100, %v1100
        %v1155 = vmul.f32 %v1102, %v1102
        %v1156 = vadd.f32 %v1148, %v1152
        %v1157 = vadd.f32 %v1149, %v1153
        %v1158 = vadd.f32 %v1150, %v1154
        %v1159 = vadd.f32 %v1151, %v1155
        %v1160 = vrsqrt.pop %v1156
        %v1161 = vmul.f32 %v1156, %v1160
        %vm1162 = vcmp.eq.f32.partialorder %v1156, inf
        %v1163 = vsel %vm1162, %v1156, %v1161
        %vm1164 = vcmp.eq.f32.partialorder %v1156, 0.0
        %v1165 = vand.u32 %v1156, 2147483648
        %v1166 = vsel %vm1164, %v1165, %v1163
        %v1167 = vrsqrt.pop %v1157
        %v1168 = vmul.f32 %v1157, %v1167
        %vm1169 = vcmp.eq.f32.partialorder %v1157, inf
        %v1170 = vsel %vm1169, %v1157, %v1168
        %vm1171 = vcmp.eq.f32.partialorder %v1157, 0.0
        %v1172 = vand.u32 %v1157, 2147483648
        %v1173 = vsel %vm1171, %v1172, %v1170
        %v1174 = vrsqrt.pop %v1158
        %v1175 = vmul.f32 %v1158, %v1174
        %vm1176 = vcmp.eq.f32.partialorder %v1158, inf
        %v1177 = vsel %vm1176, %v1158, %v1175
        %vm1178 = vcmp.eq.f32.partialorder %v1158, 0.0
        %v1179 = vand.u32 %v1158, 2147483648
        %v1180 = vsel %vm1178, %v1179, %v1177
        %v1181 = vrsqrt.pop %v1159
        %v1182 = vmul.f32 %v1159, %v1181
        %vm1183 = vcmp.eq.f32.partialorder %v1159, inf
        %v1184 = vsel %vm1183, %v1159, %v1182
        %vm1185 = vcmp.eq.f32.partialorder %v1159, 0.0
        %v1186 = vand.u32 %v1159, 2147483648
        %v1187 = vsel %vm1185, %v1186, %v1184
        %v1188 = vxor.u32 %v1166, 2147483648
        %v1189 = vxor.u32 %v1173, 2147483648
        %v1190 = vxor.u32 %v1180, 2147483648
        %v1191 = vxor.u32 %v1187, 2147483648
        %v1192 = vmul.f32 %v1188, 1.442695
        %v1193 = vpow.pop %v1192
        %v1194 = vmul.f32 %v1189, 1.442695
        %v1195 = vpow.pop %v1194
        %v1196 = vmul.f32 %v1190, 1.442695
        %v1197 = vpow.pop %v1196
        %v1198 = vmul.f32 %v1191, 1.442695
        %v1199 = vpow.pop %v1198
        %v1200 = vadd.f32 %v1193, 1.0
        %v1201 = vadd.f32 %v1195, 1.0
        %v1202 = vadd.f32 %v1197, 1.0
        %v1203 = vadd.f32 %v1199, 1.0
        %v1204 = vrcp.pop %v1200
        %v1205 = vmul.f32 1.0, %v1204
        %v1206 = vrcp.pop %v1201
        %v1207 = vmul.f32 1.0, %v1206
        %v1208 = vrcp.pop %v1202
        %v1209 = vmul.f32 1.0, %v1208
        %v1210 = vrcp.pop %v1203
        %v1211 = vmul.f32 1.0, %v1210
        %v1212 = vmul.f32 %v1070, %v1205
        %v1213 = vmul.f32 %v1072, %v1207
        %v1214 = vmul.f32 %v1076, %v1209
        %v1215 = vmul.f32 %v1078, %v1211
        %v1216 = vmul.f32 %v1082, %v1205
        %v1217 = vmul.f32 %v1084, %v1207
        %v1218 = vmul.f32 %v1088, %v1209
        %v1219 = vmul.f32 %v1090, %v1211
        %v1220 = vmul.f32 %v1094, %v1205
        %v1221 = vmul.f32 %v1096, %v1207
        %v1222 = vmul.f32 %v1100, %v1209
        %v1223 = vmul.f32 %v1102, %v1211
        %v1224 = vld [vmem:[%s7] sm:$0xff]
        %v1225 = vld [vmem:[%s7 + $0x8] sm:$0xff]
        %v1226 = vld [vmem:[%s7 + $0x10] sm:$0xff]
        %v1227 = vld [vmem:[%s7 + $0x18] sm:$0xff]
        %v1228 = vld [vmem:[%s7 + $0x20] sm:$0xff]
        %v1229 = vld [vmem:[%s7 + $0x28] sm:$0xff]
        %v1231 = vsel %vm966, %v1224, 0
        %v1234 = vsel %vm966, %v1225, 0
        %v1237 = vsel %vm966, %v1226, 0
        %v1240 = vsel %vm966, %v1227, 0
        %v1243 = vsel %vm966, %v1228, 0
        %v1246 = vsel %vm966, %v1229, 0
        %1248 = vmatprep.subr.mxu0 %v1213
        %1249 = vmatpush1.msra.mxu0 %v1212
        %1250 = vmatprep.subr.mxu0 %v1215
        %1251 = vmatpush1.msra.mxu0 %v1214
        %1252 = vmatprep.subr.mxu0 %v1217
        %1253 = vmatpush1.msra.mxu0 %v1216
        %1254 = vmatprep.subr.mxu0 %v1219
        %1255 = vmatpush1.msra.mxu0 %v1218
        %1256 = vmatprep.subr.mxu0 %v1221
        %1257 = vmatpush1.msra.mxu0 %v1220
        %1258 = vmatprep.subr.mxu0 %v1223
        %1259 = vmatpush1.msra.mxu0 %v1222
        %1260 = vmatprep.subr.mxu0 0.0
        %1261 = vmatpush1.msra.mxu0 0.0
        %1262 = vmatprep.subr.mxu0 0.0
        %1263 = vmatpush1.msra.mxu0 0.0
        %1264 = vmatprep.subr.mxu0 0.0
        %1265 = vmatpush1.msra.mxu0 0.0
        %1266 = vmatprep.subr.mxu0 0.0
        %1267 = vmatpush1.msra.mxu0 0.0
        %1268 = vmatprep.subr.mxu0 0.0
        %1269 = vmatpush1.msra.mxu0 0.0
        %1270 = vmatprep.subr.mxu0 0.0
        %1271 = vmatpush1.msra.mxu0 0.0
        %1272 = vmatprep.subr.mxu0 0.0
        %1273 = vmatpush1.msra.mxu0 0.0
        %1274 = vmatprep.subr.mxu0 0.0
        %1275 = vmatpush1.msra.mxu0 0.0
        %1276 = vmatprep.subr.mxu0 0.0
        %1277 = vmatpush1.msra.mxu0 0.0
        %1278 = vmatprep.subr.mxu0 0.0
        %1279 = vmatpush1.msra.mxu0 0.0
        %1280 = vmatprep.subr.mxu0 0.0
        %1281 = vmatpush1.msra.mxu0 0.0
        %1282 = vmatprep.subr.mxu0 0.0
        %1283 = vmatpush1.msra.mxu0 0.0
        %1284 = vmatprep.subr.mxu0 0.0
        %1285 = vmatpush1.msra.mxu0 0.0
        %1286 = vmatprep.subr.mxu0 0.0
        %1287 = vmatpush1.msra.mxu0 0.0
        %1288 = vmatprep.subr.mxu0 0.0
        %1289 = vmatpush1.msra.mxu0 0.0
        %1290 = vmatprep.subr.mxu0 0.0
        %1291 = vmatpush1.msra.mxu0 0.0
        %1292 = vmatprep.subr.mxu0 0.0
        %1293 = vmatpush1.msra.mxu0 0.0
        %1294 = vmatprep.subr.mxu0 0.0
        %1295 = vmatpush1.msra.mxu0 0.0
        %1296 = vmatprep.subr.mxu0 0.0
        %1297 = vmatpush1.msra.mxu0 0.0
        %1298 = vmatprep.subr.mxu0 0.0
        %1299 = vmatpush1.msra.mxu0 0.0
        %1300 = vmatprep.subr.mxu0 0.0
        %1301 = vmatpush1.msra.mxu0 0.0
        %1302 = vmatprep.subr.mxu0 0.0
        %1303 = vmatpush1.msra.mxu0 0.0
        %1304 = vmatprep.subr.mxu0 0.0
        %1305 = vmatpush1.msra.mxu0 0.0
        %1306 = vmatprep.subr.mxu0 0.0
        %1307 = vmatpush1.msra.mxu0 0.0
        %1308 = vmatprep.subr.mxu0 0.0
        %1309 = vmatpush1.msra.mxu0 0.0
        %1310 = vmatprep.subr.mxu0 0.0
        %1311 = vmatpush1.msra.mxu0 0.0
        %1312 = vmatprep.mubr.f32.mxu0 0.0
        %1313 = vmatmul.mubr.f32.gmra.mrb[0].mxu0 %v1231
        %v1314 = vpop.f32.mrb[0].mxu0
        %v1315 = vadd.f32 0.0, %v1314
        %v1316 = vpop.f32.mrb[0].mxu0
        %v1317 = vadd.f32 0.0, %v1316
        %1318 = vmatprep.mubr.f32.mxu0 0.0
        %1319 = vmatmul.mubr.f32.gmra.mrb[0].mxu0 %v1234
        %v1320 = vpop.f32.mrb[0].mxu0
        %v1321 = vadd.f32 0.0, %v1320
        %v1322 = vpop.f32.mrb[0].mxu0
        %v1323 = vadd.f32 0.0, %v1322
        %1324 = vmatprep.mubr.f32.mxu0 0.0
        %1325 = vmatmul.mubr.f32.gmra.mrb[0].mxu0 %v1237
        %v1326 = vpop.f32.mrb[0].mxu0
        %v1327 = vadd.f32 0.0, %v1326
        %v1328 = vpop.f32.mrb[0].mxu0
        %v1329 = vadd.f32 0.0, %v1328
        %1330 = vmatprep.mubr.f32.mxu0 0.0
        %1331 = vmatmul.mubr.f32.gmra.mrb[0].mxu0 %v1240
        %v1332 = vpop.f32.mrb[0].mxu0
        %v1333 = vadd.f32 0.0, %v1332
        %v1334 = vpop.f32.mrb[0].mxu0
        %v1335 = vadd.f32 0.0, %v1334
        %1336 = vmatprep.mubr.f32.mxu0 0.0
        %1337 = vmatmul.mubr.f32.gmra.mrb[0].mxu0 %v1243
        %v1338 = vpop.f32.mrb[0].mxu0
        %v1339 = vadd.f32 0.0, %v1338
        %v1340 = vpop.f32.mrb[0].mxu0
        %v1341 = vadd.f32 0.0, %v1340
        %1342 = vmatprep.mubr.f32.mxu0 0.0
        %1343 = vmatmul.mubr.f32.gmra.mrb[0].mxu0 %v1246
        %v1344 = vpop.f32.mrb[0].mxu0
        %v1345 = vadd.f32 0.0, %v1344
        %v1346 = vpop.f32.mrb[0].mxu0
        %v1347 = vadd.f32 0.0, %v1346
        %1348 = vdwg.mxu0
        %v1349 = vmul.f32 %v1315, %v1315
        %v1350 = vmul.f32 %v1317, %v1317
        %v1351 = vmul.f32 %v1321, %v1321
        %v1352 = vmul.f32 %v1323, %v1323
        %v1353 = vmul.f32 %v1327, %v1327
        %v1354 = vmul.f32 %v1329, %v1329
        %v1355 = vmul.f32 %v1333, %v1333
        %v1356 = vmul.f32 %v1335, %v1335
        %v1357 = vadd.f32 %v1349, %v1353
        %v1358 = vadd.f32 %v1350, %v1354
        %v1359 = vadd.f32 %v1351, %v1355
        %v1360 = vadd.f32 %v1352, %v1356
        %v1361 = vmul.f32 %v1339, %v1339
        %v1362 = vmul.f32 %v1341, %v1341
        %v1363 = vmul.f32 %v1345, %v1345
        %v1364 = vmul.f32 %v1347, %v1347
        %v1365 = vadd.f32 %v1357, %v1361
        %v1366 = vadd.f32 %v1358, %v1362
        %v1367 = vadd.f32 %v1359, %v1363
        %v1368 = vadd.f32 %v1360, %v1364
        %v1369 = vrsqrt.pop %v1365
        %v1370 = vmul.f32 %v1365, %v1369
        %vm1371 = vcmp.eq.f32.partialorder %v1365, inf
        %v1372 = vsel %vm1371, %v1365, %v1370
        %vm1373 = vcmp.eq.f32.partialorder %v1365, 0.0
        %v1374 = vand.u32 %v1365, 2147483648
        %v1375 = vsel %vm1373, %v1374, %v1372
        %v1376 = vrsqrt.pop %v1366
        %v1377 = vmul.f32 %v1366, %v1376
        %vm1378 = vcmp.eq.f32.partialorder %v1366, inf
        %v1379 = vsel %vm1378, %v1366, %v1377
        %vm1380 = vcmp.eq.f32.partialorder %v1366, 0.0
        %v1381 = vand.u32 %v1366, 2147483648
        %v1382 = vsel %vm1380, %v1381, %v1379
        %v1383 = vrsqrt.pop %v1367
        %v1384 = vmul.f32 %v1367, %v1383
        %vm1385 = vcmp.eq.f32.partialorder %v1367, inf
        %v1386 = vsel %vm1385, %v1367, %v1384
        %vm1387 = vcmp.eq.f32.partialorder %v1367, 0.0
        %v1388 = vand.u32 %v1367, 2147483648
        %v1389 = vsel %vm1387, %v1388, %v1386
        %v1390 = vrsqrt.pop %v1368
        %v1391 = vmul.f32 %v1368, %v1390
        %vm1392 = vcmp.eq.f32.partialorder %v1368, inf
        %v1393 = vsel %vm1392, %v1368, %v1391
        %vm1394 = vcmp.eq.f32.partialorder %v1368, 0.0
        %v1395 = vand.u32 %v1368, 2147483648
        %v1396 = vsel %vm1394, %v1395, %v1393
        %v1397 = vxor.u32 %v1375, 2147483648
        %v1398 = vxor.u32 %v1382, 2147483648
        %v1399 = vxor.u32 %v1389, 2147483648
        %v1400 = vxor.u32 %v1396, 2147483648
        %v1401 = vmul.f32 %v1397, 1.442695
        %v1402 = vpow.pop %v1401
        %v1403 = vmul.f32 %v1398, 1.442695
        %v1404 = vpow.pop %v1403
        %v1405 = vmul.f32 %v1399, 1.442695
        %v1406 = vpow.pop %v1405
        %v1407 = vmul.f32 %v1400, 1.442695
        %v1408 = vpow.pop %v1407
        %v1409 = vadd.f32 %v1402, 1.0
        %v1410 = vadd.f32 %v1404, 1.0
        %v1411 = vadd.f32 %v1406, 1.0
        %v1412 = vadd.f32 %v1408, 1.0
        %v1413 = vrcp.pop %v1409
        %v1414 = vmul.f32 1.0, %v1413
        %v1415 = vrcp.pop %v1410
        %v1416 = vmul.f32 1.0, %v1415
        %v1417 = vrcp.pop %v1411
        %v1418 = vmul.f32 1.0, %v1417
        %v1419 = vrcp.pop %v1412
        %v1420 = vmul.f32 1.0, %v1419
        %v1421 = vmul.f32 %v1315, %v1414
        %v1422 = vmul.f32 %v1317, %v1416
        %v1423 = vmul.f32 %v1321, %v1418
        %v1424 = vmul.f32 %v1323, %v1420
        %v1425 = vmul.f32 %v1327, %v1414
        %v1426 = vmul.f32 %v1329, %v1416
        %v1427 = vmul.f32 %v1333, %v1418
        %v1428 = vmul.f32 %v1335, %v1420
        %v1429 = vmul.f32 %v1339, %v1414
        %v1430 = vmul.f32 %v1341, %v1416
        %v1431 = vmul.f32 %v1345, %v1418
        %v1432 = vmul.f32 %v1347, %v1420
        %v1433 = vmul.f32 %v1106, %v1124
        %v1434 = vmul.f32 %v1108, %v1126
        %v1435 = vmul.f32 %v1112, %v1130
        %v1436 = vmul.f32 %v1114, %v1132
        %v1437 = vadd.f32 %v1433, %v1435
        %v1438 = vadd.f32 %v1434, %v1436
        %v1439 = vmul.f32 %v1118, %v1136
        %v1440 = vmul.f32 %v1120, %v1138
        %v1441 = vadd.f32 %v1437, %v1439
        %v1442 = vadd.f32 %v1438, %v1440
        %v1443 = vmul.f32 %v793, %v1124
        %v1444 = vmul.f32 %v795, %v1126
        %v1445 = vmul.f32 %v793, %v1130
        %v1446 = vmul.f32 %v795, %v1132
        %v1447 = vmul.f32 %v793, %v1136
        %v1448 = vmul.f32 %v795, %v1138
        %v1449 = vld [vmem:[%s4] sm:$0xff]
        %v1450 = vld [vmem:[%s4 + $0x8] sm:$0xff]
        %v1451 = vld [vmem:[%s4 + $0x10] sm:$0xff]
        %v1452 = vld [vmem:[%s4 + $0x18] sm:$0xff]
        %v1453 = vld [vmem:[%s5] sm:$0xff]
        %v1454 = vld [vmem:[%s5 + $0x8] sm:$0xff]
        %v1455 = vld [vmem:[%s5 + $0x10] sm:$0xff]
        %v1456 = vld [vmem:[%s5 + $0x18] sm:$0xff]
        %vm1457 = vcmask 64512
        %v1459 = vsel %vm1457, %v1453, 0
        %v1462 = vsel %vm1457, %v1454, 0
        %v1465 = vsel %vm1457, %v1455, 0
        %v1468 = vsel %vm1457, %v1456, 0
        %1470 = vmatprep.subr.mxu0 %v1442
        %1471 = vmatpush1.msra.mxu0 %v1441
        %1472 = vmatprep.subr.mxu0 0.0
        %1473 = vmatpush1.msra.mxu0 0.0
        %1474 = vmatprep.subr.mxu0 0.0
        %1475 = vmatpush1.msra.mxu0 0.0
        %1476 = vmatprep.subr.mxu0 0.0
        %1477 = vmatpush1.msra.mxu0 0.0
        %1478 = vmatprep.subr.mxu0 0.0
        %1479 = vmatpush1.msra.mxu0 0.0
        %1480 = vmatprep.subr.mxu0 0.0
        %1481 = vmatpush1.msra.mxu0 0.0
        %1482 = vmatprep.subr.mxu0 0.0
        %1483 = vmatpush1.msra.mxu0 0.0
        %1484 = vmatprep.subr.mxu0 0.0
        %1485 = vmatpush1.msra.mxu0 0.0
        %1486 = vmatprep.subr.mxu0 0.0
        %1487 = vmatpush1.msra.mxu0 0.0
        %1488 = vmatprep.subr.mxu0 0.0
        %1489 = vmatpush1.msra.mxu0 0.0
        %1490 = vmatprep.subr.mxu0 0.0
        %1491 = vmatpush1.msra.mxu0 0.0
        %1492 = vmatprep.subr.mxu0 0.0
        %1493 = vmatpush1.msra.mxu0 0.0
        %1494 = vmatprep.subr.mxu0 0.0
        %1495 = vmatpush1.msra.mxu0 0.0
        %1496 = vmatprep.subr.mxu0 0.0
        %1497 = vmatpush1.msra.mxu0 0.0
        %1498 = vmatprep.subr.mxu0 0.0
        %1499 = vmatpush1.msra.mxu0 0.0
        %1500 = vmatprep.subr.mxu0 0.0
        %1501 = vmatpush1.msra.mxu0 0.0
        %1502 = vmatprep.subr.mxu0 0.0
        %1503 = vmatpush1.msra.mxu0 0.0
        %1504 = vmatprep.subr.mxu0 0.0
        %1505 = vmatpush1.msra.mxu0 0.0
        %1506 = vmatprep.subr.mxu0 0.0
        %1507 = vmatpush1.msra.mxu0 0.0
        %1508 = vmatprep.subr.mxu0 0.0
        %1509 = vmatpush1.msra.mxu0 0.0
        %1510 = vmatprep.subr.mxu0 0.0
        %1511 = vmatpush1.msra.mxu0 0.0
        %1512 = vmatprep.subr.mxu0 0.0
        %1513 = vmatpush1.msra.mxu0 0.0
        %1514 = vmatprep.subr.mxu0 0.0
        %1515 = vmatpush1.msra.mxu0 0.0
        %1516 = vmatprep.subr.mxu0 0.0
        %1517 = vmatpush1.msra.mxu0 0.0
        %1518 = vmatprep.subr.mxu0 0.0
        %1519 = vmatpush1.msra.mxu0 0.0
        %1520 = vmatprep.subr.mxu0 0.0
        %1521 = vmatpush1.msra.mxu0 0.0
        %1522 = vmatprep.subr.mxu0 0.0
        %1523 = vmatpush1.msra.mxu0 0.0
        %1524 = vmatprep.subr.mxu0 0.0
        %1525 = vmatpush1.msra.mxu0 0.0
        %1526 = vmatprep.subr.mxu0 0.0
        %1527 = vmatpush1.msra.mxu0 0.0
        %1528 = vmatprep.subr.mxu0 0.0
        %1529 = vmatpush1.msra.mxu0 0.0
        %1530 = vmatprep.subr.mxu0 0.0
        %1531 = vmatpush1.msra.mxu0 0.0
        %1532 = vmatprep.subr.mxu0 0.0
        %1533 = vmatpush1.msra.mxu0 0.0
        %1534 = vmatprep.mubr.f32.mxu0 0.0
        %1535 = vmatmul.mubr.f32.gmra.mrb[0].mxu0 %v1459
        %v1536 = vpop.f32.mrb[0].mxu0
        %v1537 = vadd.f32 0.0, %v1536
        %v1538 = vpop.f32.mrb[0].mxu0
        %v1539 = vadd.f32 0.0, %v1538
        %1540 = vmatprep.mubr.f32.mxu0 0.0
        %1541 = vmatmul.mubr.f32.gmra.mrb[0].mxu0 %v1462
        %v1542 = vpop.f32.mrb[0].mxu0
        %v1543 = vadd.f32 0.0, %v1542
        %v1544 = vpop.f32.mrb[0].mxu0
        %v1545 = vadd.f32 0.0, %v1544
        %1546 = vmatprep.mubr.f32.mxu0 0.0
        %1547 = vmatmul.mubr.f32.gmra.mrb[0].mxu0 %v1465
        %v1548 = vpop.f32.mrb[0].mxu0
        %v1549 = vadd.f32 0.0, %v1548
        %v1550 = vpop.f32.mrb[0].mxu0
        %v1551 = vadd.f32 0.0, %v1550
        %1552 = vmatprep.mubr.f32.mxu0 0.0
        %1553 = vmatmul.mubr.f32.gmra.mrb[0].mxu0 %v1468
        %v1554 = vpop.f32.mrb[0].mxu0
        %v1555 = vadd.f32 0.0, %v1554
        %v1556 = vpop.f32.mrb[0].mxu0
        %v1557 = vadd.f32 0.0, %v1556
        %1558 = vdwg.mxu0
        %v1560 = vsel %vm686, %v1449, 0
        %v1563 = vsel %vm686, %v1450, 0
        %v1566 = vsel %vm686, %v1451, 0
        %v1569 = vsel %vm686, %v1452, 0
        %1571 = vmatprep.subr.mxu0 %v947
        %1572 = vmatpush1.msra.mxu0 %v946
        %1573 = vmatprep.subr.mxu0 %v949
        %1574 = vmatpush1.msra.mxu0 %v948
        %1575 = vmatprep.subr.mxu0 %v951
        %1576 = vmatpush1.msra.mxu0 %v950
        %1577 = vmatprep.subr.mxu0 %v953
        %1578 = vmatpush1.msra.mxu0 %v952
        %1579 = vmatprep.subr.mxu0 0.0
        %1580 = vmatpush1.msra.mxu0 0.0
        %1581 = vmatprep.subr.mxu0 0.0
        %1582 = vmatpush1.msra.mxu0 0.0
        %1583 = vmatprep.subr.mxu0 0.0
        %1584 = vmatpush1.msra.mxu0 0.0
        %1585 = vmatprep.subr.mxu0 0.0
        %1586 = vmatpush1.msra.mxu0 0.0
        %1587 = vmatprep.subr.mxu0 0.0
        %1588 = vmatpush1.msra.mxu0 0.0
        %1589 = vmatprep.subr.mxu0 0.0
        %1590 = vmatpush1.msra.mxu0 0.0
        %1591 = vmatprep.subr.mxu0 0.0
        %1592 = vmatpush1.msra.mxu0 0.0
        %1593 = vmatprep.subr.mxu0 0.0
        %1594 = vmatpush1.msra.mxu0 0.0
        %1595 = vmatprep.subr.mxu0 0.0
        %1596 = vmatpush1.msra.mxu0 0.0
        %1597 = vmatprep.subr.mxu0 0.0
        %1598 = vmatpush1.msra.mxu0 0.0
        %1599 = vmatprep.subr.mxu0 0.0
        %1600 = vmatpush1.msra.mxu0 0.0
        %1601 = vmatprep.subr.mxu0 0.0
        %1602 = vmatpush1.msra.mxu0 0.0
        %1603 = vmatprep.subr.mxu0 0.0
        %1604 = vmatpush1.msra.mxu0 0.0
        %1605 = vmatprep.subr.mxu0 0.0
        %1606 = vmatpush1.msra.mxu0 0.0
        %1607 = vmatprep.subr.mxu0 0.0
        %1608 = vmatpush1.msra.mxu0 0.0
        %1609 = vmatprep.subr.mxu0 0.0
        %1610 = vmatpush1.msra.mxu0 0.0
        %1611 = vmatprep.subr.mxu0 0.0
        %1612 = vmatpush1.msra.mxu0 0.0
        %1613 = vmatprep.subr.mxu0 0.0
        %1614 = vmatpush1.msra.mxu0 0.0
        %1615 = vmatprep.subr.mxu0 0.0
        %1616 = vmatpush1.msra.mxu0 0.0
        %1617 = vmatprep.subr.mxu0 0.0
        %1618 = vmatpush1.msra.mxu0 0.0
        %1619 = vmatprep.subr.mxu0 0.0
        %1620 = vmatpush1.msra.mxu0 0.0
        %1621 = vmatprep.subr.mxu0 0.0
        %1622 = vmatpush1.msra.mxu0 0.0
        %1623 = vmatprep.subr.mxu0 0.0
        %1624 = vmatpush1.msra.mxu0 0.0
        %1625 = vmatprep.subr.mxu0 0.0
        %1626 = vmatpush1.msra.mxu0 0.0
        %1627 = vmatprep.subr.mxu0 0.0
        %1628 = vmatpush1.msra.mxu0 0.0
        %1629 = vmatprep.subr.mxu0 0.0
        %1630 = vmatpush1.msra.mxu0 0.0
        %1631 = vmatprep.subr.mxu0 0.0
        %1632 = vmatpush1.msra.mxu0 0.0
        %1633 = vmatprep.subr.mxu0 0.0
        %1634 = vmatpush1.msra.mxu0 0.0
        %1635 = vmatprep.mubr.f32.mxu0 0.0
        %1636 = vmatmul.mubr.f32.gmra.mrb[0].mxu0 %v1560
        %v1637 = vpop.f32.mrb[0].mxu0
        %v1638 = vadd.f32 %v1537, %v1637
        %v1639 = vpop.f32.mrb[0].mxu0
        %v1640 = vadd.f32 %v1539, %v1639
        %1641 = vmatprep.mubr.f32.mxu0 0.0
        %1642 = vmatmul.mubr.f32.gmra.mrb[0].mxu0 %v1563
        %v1643 = vpop.f32.mrb[0].mxu0
        %v1644 = vadd.f32 %v1543, %v1643
        %v1645 = vpop.f32.mrb[0].mxu0
        %v1646 = vadd.f32 %v1545, %v1645
        %1647 = vmatprep.mubr.f32.mxu0 0.0
        %1648 = vmatmul.mubr.f32.gmra.mrb[0].mxu0 %v1566
        %v1649 = vpop.f32.mrb[0].mxu0
        %v1650 = vadd.f32 %v1549, %v1649
        %v1651 = vpop.f32.mrb[0].mxu0
        %v1652 = vadd.f32 %v1551, %v1651
        %1653 = vmatprep.mubr.f32.mxu0 0.0
        %1654 = vmatmul.mubr.f32.gmra.mrb[0].mxu0 %v1569
        %v1655 = vpop.f32.mrb[0].mxu0
        %v1656 = vadd.f32 %v1555, %v1655
        %v1657 = vpop.f32.mrb[0].mxu0
        %v1658 = vadd.f32 %v1557, %v1657
        %1659 = vdwg.mxu0
        %1661 = vset.pattern.permute.xlu0 0
        %1662 = vperm.xlu0 %1661, %v642
        %v1663 = vpop.permute.xlu0 %1662
        %1666 = vset.pattern.permute.xlu0 0
        %1667 = vperm.xlu0 %1666, %v643
        %v1668 = vpop.permute.xlu0 %1667
        %1671 = vset.pattern.permute.xlu0 0
        %1672 = vperm.xlu0 %1671, %v644
        %v1673 = vpop.permute.xlu0 %1672
        %1676 = vset.pattern.permute.xlu0 0
        %1677 = vperm.xlu0 %1676, %v645
        %v1678 = vpop.permute.xlu0 %1677
        %v1680 = vadd.f32 %v1638, %v1663
        %v1681 = vadd.f32 %v1640, %v1663
        %v1682 = vadd.f32 %v1644, %v1668
        %v1683 = vadd.f32 %v1646, %v1668
        %v1684 = vadd.f32 %v1650, %v1673
        %v1685 = vadd.f32 %v1652, %v1673
        %v1686 = vadd.f32 %v1656, %v1678
        %v1687 = vadd.f32 %v1658, %v1678
        %v1688 = vld [vmem:[%s8] sm:$0xff]
        %v1689 = vld [vmem:[%s8 + $0x8] sm:$0xff]
        %v1690 = vld [vmem:[%s8 + $0x10] sm:$0xff]
        %v1691 = vld [vmem:[%s8 + $0x18] sm:$0xff]
        %v1692 = vld [vmem:[%s8 + $0x20] sm:$0xff]
        %v1693 = vld [vmem:[%s8 + $0x28] sm:$0xff]
        %v1694 = vld [vmem:[%s9] sm:$0xff]
        %v1695 = vld [vmem:[%s9 + $0x8] sm:$0xff]
        %v1696 = vld [vmem:[%s9 + $0x10] sm:$0xff]
        %v1697 = vld [vmem:[%s9 + $0x18] sm:$0xff]
        %v1698 = vld [vmem:[%s9 + $0x20] sm:$0xff]
        %v1699 = vld [vmem:[%s9 + $0x28] sm:$0xff]
        %vm1700 = vcmask 195584
        %v1702 = vsel %vm1700, %v1694, 0
        %v1705 = vsel %vm1700, %v1695, 0
        %v1708 = vsel %vm1700, %v1696, 0
        %v1711 = vsel %vm1700, %v1697, 0
        %v1714 = vsel %vm1700, %v1698, 0
        %v1717 = vsel %vm1700, %v1699, 0
        %1719 = vmatprep.subr.mxu0 %v1444
        %1720 = vmatpush1.msra.mxu0 %v1443
        %1721 = vmatprep.subr.mxu0 %v1446
        %1722 = vmatpush1.msra.mxu0 %v1445
        %1723 = vmatprep.subr.mxu0 %v1448
        %1724 = vmatpush1.msra.mxu0 %v1447
        %1725 = vmatprep.subr.mxu0 0.0
        %1726 = vmatpush1.msra.mxu0 0.0
        %1727 = vmatprep.subr.mxu0 0.0
        %1728 = vmatpush1.msra.mxu0 0.0
        %1729 = vmatprep.subr.mxu0 0.0
        %1730 = vmatpush1.msra.mxu0 0.0
        %1731 = vmatprep.subr.mxu0 0.0
        %1732 = vmatpush1.msra.mxu0 0.0
        %1733 = vmatprep.subr.mxu0 0.0
        %1734 = vmatpush1.msra.mxu0 0.0
        %1735 = vmatprep.subr.mxu0 0.0
        %1736 = vmatpush1.msra.mxu0 0.0
        %1737 = vmatprep.subr.mxu0 0.0
        %1738 = vmatpush1.msra.mxu0 0.0
        %1739 = vmatprep.subr.mxu0 0.0
        %1740 = vmatpush1.msra.mxu0 0.0
        %1741 = vmatprep.subr.mxu0 0.0
        %1742 = vmatpush1.msra.mxu0 0.0
        %1743 = vmatprep.subr.mxu0 0.0
        %1744 = vmatpush1.msra.mxu0 0.0
        %1745 = vmatprep.subr.mxu0 0.0
        %1746 = vmatpush1.msra.mxu0 0.0
        %1747 = vmatprep.subr.mxu0 0.0
        %1748 = vmatpush1.msra.mxu0 0.0
        %1749 = vmatprep.subr.mxu0 0.0
        %1750 = vmatpush1.msra.mxu0 0.0
        %1751 = vmatprep.subr.mxu0 0.0
        %1752 = vmatpush1.msra.mxu0 0.0
        %1753 = vmatprep.subr.mxu0 0.0
        %1754 = vmatpush1.msra.mxu0 0.0
        %1755 = vmatprep.subr.mxu0 0.0
        %1756 = vmatpush1.msra.mxu0 0.0
        %1757 = vmatprep.subr.mxu0 0.0
        %1758 = vmatpush1.msra.mxu0 0.0
        %1759 = vmatprep.subr.mxu0 0.0
        %1760 = vmatpush1.msra.mxu0 0.0
        %1761 = vmatprep.subr.mxu0 0.0
        %1762 = vmatpush1.msra.mxu0 0.0
        %1763 = vmatprep.subr.mxu0 0.0
        %1764 = vmatpush1.msra.mxu0 0.0
        %1765 = vmatprep.subr.mxu0 0.0
        %1766 = vmatpush1.msra.mxu0 0.0
        %1767 = vmatprep.subr.mxu0 0.0
        %1768 = vmatpush1.msra.mxu0 0.0
        %1769 = vmatprep.subr.mxu0 0.0
        %1770 = vmatpush1.msra.mxu0 0.0
        %1771 = vmatprep.subr.mxu0 0.0
        %1772 = vmatpush1.msra.mxu0 0.0
        %1773 = vmatprep.subr.mxu0 0.0
        %1774 = vmatpush1.msra.mxu0 0.0
        %1775 = vmatprep.subr.mxu0 0.0
        %1776 = vmatpush1.msra.mxu0 0.0
        %1777 = vmatprep.subr.mxu0 0.0
        %1778 = vmatpush1.msra.mxu0 0.0
        %1779 = vmatprep.subr.mxu0 0.0
        %1780 = vmatpush1.msra.mxu0 0.0
        %1781 = vmatprep.subr.mxu0 0.0
        %1782 = vmatpush1.msra.mxu0 0.0
        %1783 = vmatprep.mubr.f32.mxu0 0.0
        %1784 = vmatmul.mubr.f32.gmra.mrb[0].mxu0 %v1702
        %v1785 = vpop.f32.mrb[0].mxu0
        %v1786 = vadd.f32 0.0, %v1785
        %v1787 = vpop.f32.mrb[0].mxu0
        %v1788 = vadd.f32 0.0, %v1787
        %1789 = vmatprep.mubr.f32.mxu0 0.0
        %1790 = vmatmul.mubr.f32.gmra.mrb[0].mxu0 %v1705
        %v1791 = vpop.f32.mrb[0].mxu0
        %v1792 = vadd.f32 0.0, %v1791
        %v1793 = vpop.f32.mrb[0].mxu0
        %v1794 = vadd.f32 0.0, %v1793
        %1795 = vmatprep.mubr.f32.mxu0 0.0
        %1796 = vmatmul.mubr.f32.gmra.mrb[0].mxu0 %v1708
        %v1797 = vpop.f32.mrb[0].mxu0
        %v1798 = vadd.f32 0.0, %v1797
        %v1799 = vpop.f32.mrb[0].mxu0
        %v1800 = vadd.f32 0.0, %v1799
        %1801 = vmatprep.mubr.f32.mxu0 0.0
        %1802 = vmatmul.mubr.f32.gmra.mrb[0].mxu0 %v1711
        %v1803 = vpop.f32.mrb[0].mxu0
        %v1804 = vadd.f32 0.0, %v1803
        %v1805 = vpop.f32.mrb[0].mxu0
        %v1806 = vadd.f32 0.0, %v1805
        %1807 = vmatprep.mubr.f32.mxu0 0.0
        %1808 = vmatmul.mubr.f32.gmra.mrb[0].mxu0 %v1714
        %v1809 = vpop.f32.mrb[0].mxu0
        %v1810 = vadd.f32 0.0, %v1809
        %v1811 = vpop.f32.mrb[0].mxu0
        %v1812 = vadd.f32 0.0, %v1811
        %1813 = vmatprep.mubr.f32.mxu0 0.0
        %1814 = vmatmul.mubr.f32.gmra.mrb[0].mxu0 %v1717
        %v1815 = vpop.f32.mrb[0].mxu0
        %v1816 = vadd.f32 0.0, %v1815
        %v1817 = vpop.f32.mrb[0].mxu0
        %v1818 = vadd.f32 0.0, %v1817
        %1819 = vdwg.mxu0
        %v1821 = vsel %vm966, %v1688, 0
        %v1824 = vsel %vm966, %v1689, 0
        %v1827 = vsel %vm966, %v1690, 0
        %v1830 = vsel %vm966, %v1691, 0
        %v1833 = vsel %vm966, %v1692, 0
        %v1836 = vsel %vm966, %v1693, 0
        %1838 = vmatprep.subr.mxu0 %v1422
        %1839 = vmatpush1.msra.mxu0 %v1421
        %1840 = vmatprep.subr.mxu0 %v1424
        %1841 = vmatpush1.msra.mxu0 %v1423
        %1842 = vmatprep.subr.mxu0 %v1426
        %1843 = vmatpush1.msra.mxu0 %v1425
        %1844 = vmatprep.subr.mxu0 %v1428
        %1845 = vmatpush1.msra.mxu0 %v1427
        %1846 = vmatprep.subr.mxu0 %v1430
        %1847 = vmatpush1.msra.mxu0 %v1429
        %1848 = vmatprep.subr.mxu0 %v1432
        %1849 = vmatpush1.msra.mxu0 %v1431
        %1850 = vmatprep.subr.mxu0 0.0
        %1851 = vmatpush1.msra.mxu0 0.0
        %1852 = vmatprep.subr.mxu0 0.0
        %1853 = vmatpush1.msra.mxu0 0.0
        %1854 = vmatprep.subr.mxu0 0.0
        %1855 = vmatpush1.msra.mxu0 0.0
        %1856 = vmatprep.subr.mxu0 0.0
        %1857 = vmatpush1.msra.mxu0 0.0
        %1858 = vmatprep.subr.mxu0 0.0
        %1859 = vmatpush1.msra.mxu0 0.0
        %1860 = vmatprep.subr.mxu0 0.0
        %1861 = vmatpush1.msra.mxu0 0.0
        %1862 = vmatprep.subr.mxu0 0.0
        %1863 = vmatpush1.msra.mxu0 0.0
        %1864 = vmatprep.subr.mxu0 0.0
        %1865 = vmatpush1.msra.mxu0 0.0
        %1866 = vmatprep.subr.mxu0 0.0
        %1867 = vmatpush1.msra.mxu0 0.0
        %1868 = vmatprep.subr.mxu0 0.0
        %1869 = vmatpush1.msra.mxu0 0.0
        %1870 = vmatprep.subr.mxu0 0.0
        %1871 = vmatpush1.msra.mxu0 0.0
        %1872 = vmatprep.subr.mxu0 0.0
        %1873 = vmatpush1.msra.mxu0 0.0
        %1874 = vmatprep.subr.mxu0 0.0
        %1875 = vmatpush1.msra.mxu0 0.0
        %1876 = vmatprep.subr.mxu0 0.0
        %1877 = vmatpush1.msra.mxu0 0.0
        %1878 = vmatprep.subr.mxu0 0.0
        %1879 = vmatpush1.msra.mxu0 0.0
        %1880 = vmatprep.subr.mxu0 0.0
        %1881 = vmatpush1.msra.mxu0 0.0
        %1882 = vmatprep.subr.mxu0 0.0
        %1883 = vmatpush1.msra.mxu0 0.0
        %1884 = vmatprep.subr.mxu0 0.0
        %1885 = vmatpush1.msra.mxu0 0.0
        %1886 = vmatprep.subr.mxu0 0.0
        %1887 = vmatpush1.msra.mxu0 0.0
        %1888 = vmatprep.subr.mxu0 0.0
        %1889 = vmatpush1.msra.mxu0 0.0
        %1890 = vmatprep.subr.mxu0 0.0
        %1891 = vmatpush1.msra.mxu0 0.0
        %1892 = vmatprep.subr.mxu0 0.0
        %1893 = vmatpush1.msra.mxu0 0.0
        %1894 = vmatprep.subr.mxu0 0.0
        %1895 = vmatpush1.msra.mxu0 0.0
        %1896 = vmatprep.subr.mxu0 0.0
        %1897 = vmatpush1.msra.mxu0 0.0
        %1898 = vmatprep.subr.mxu0 0.0
        %1899 = vmatpush1.msra.mxu0 0.0
        %1900 = vmatprep.subr.mxu0 0.0
        %1901 = vmatpush1.msra.mxu0 0.0
        %1902 = vmatprep.mubr.f32.mxu0 0.0
        %1903 = vmatmul.mubr.f32.gmra.mrb[0].mxu0 %v1821
        %v1904 = vpop.f32.mrb[0].mxu0
        %v1905 = vadd.f32 %v1786, %v1904
        %v1906 = vpop.f32.mrb[0].mxu0
        %v1907 = vadd.f32 %v1788, %v1906
        %1908 = vmatprep.mubr.f32.mxu0 0.0
        %1909 = vmatmul.mubr.f32.gmra.mrb[0].mxu0 %v1824
        %v1910 = vpop.f32.mrb[0].mxu0
        %v1911 = vadd.f32 %v1792, %v1910
        %v1912 = vpop.f32.mrb[0].mxu0
        %v1913 = vadd.f32 %v1794, %v1912
        %1914 = vmatprep.mubr.f32.mxu0 0.0
        %1915 = vmatmul.mubr.f32.gmra.mrb[0].mxu0 %v1827
        %v1916 = vpop.f32.mrb[0].mxu0
        %v1917 = vadd.f32 %v1798, %v1916
        %v1918 = vpop.f32.mrb[0].mxu0
        %v1919 = vadd.f32 %v1800, %v1918
        %1920 = vmatprep.mubr.f32.mxu0 0.0
        %1921 = vmatmul.mubr.f32.gmra.mrb[0].mxu0 %v1830
        %v1922 = vpop.f32.mrb[0].mxu0
        %v1923 = vadd.f32 %v1804, %v1922
        %v1924 = vpop.f32.mrb[0].mxu0
        %v1925 = vadd.f32 %v1806, %v1924
        %1926 = vmatprep.mubr.f32.mxu0 0.0
        %1927 = vmatmul.mubr.f32.gmra.mrb[0].mxu0 %v1833
        %v1928 = vpop.f32.mrb[0].mxu0
        %v1929 = vadd.f32 %v1810, %v1928
        %v1930 = vpop.f32.mrb[0].mxu0
        %v1931 = vadd.f32 %v1812, %v1930
        %1932 = vmatprep.mubr.f32.mxu0 0.0
        %1933 = vmatmul.mubr.f32.gmra.mrb[0].mxu0 %v1836
        %v1934 = vpop.f32.mrb[0].mxu0
        %v1935 = vadd.f32 %v1816, %v1934
        %v1936 = vpop.f32.mrb[0].mxu0
        %v1937 = vadd.f32 %v1818, %v1936
        %1938 = vdwg.mxu0
        %v1939 = vld [vmem:[%s10] sm:$0xff]
        %v1940 = vld [vmem:[%s10 + $0x8] sm:$0xff]
        %v1941 = vld [vmem:[%s10 + $0x10] sm:$0xff]
        %v1942 = vld [vmem:[%s10 + $0x18] sm:$0xff]
        %v1944 = vsel %vm686, %v1939, 0
        %v1947 = vsel %vm686, %v1940, 0
        %v1950 = vsel %vm686, %v1941, 0
        %v1953 = vsel %vm686, %v1942, 0
        %1955 = vmatprep.subr.mxu0 %v1681
        %1956 = vmatpush1.msra.mxu0 %v1680
        %1957 = vmatprep.subr.mxu0 %v1683
        %1958 = vmatpush1.msra.mxu0 %v1682
        %1959 = vmatprep.subr.mxu0 %v1685
        %1960 = vmatpush1.msra.mxu0 %v1684
        %1961 = vmatprep.subr.mxu0 %v1687
        %1962 = vmatpush1.msra.mxu0 %v1686
        %1963 = vmatprep.subr.mxu0 0.0
        %1964 = vmatpush1.msra.mxu0 0.0
        %1965 = vmatprep.subr.mxu0 0.0
        %1966 = vmatpush1.msra.mxu0 0.0
        %1967 = vmatprep.subr.mxu0 0.0
        %1968 = vmatpush1.msra.mxu0 0.0
        %1969 = vmatprep.subr.mxu0 0.0
        %1970 = vmatpush1.msra.mxu0 0.0
        %1971 = vmatprep.subr.mxu0 0.0
        %1972 = vmatpush1.msra.mxu0 0.0
        %1973 = vmatprep.subr.mxu0 0.0
        %1974 = vmatpush1.msra.mxu0 0.0
        %1975 = vmatprep.subr.mxu0 0.0
        %1976 = vmatpush1.msra.mxu0 0.0
        %1977 = vmatprep.subr.mxu0 0.0
        %1978 = vmatpush1.msra.mxu0 0.0
        %1979 = vmatprep.subr.mxu0 0.0
        %1980 = vmatpush1.msra.mxu0 0.0
        %1981 = vmatprep.subr.mxu0 0.0
        %1982 = vmatpush1.msra.mxu0 0.0
        %1983 = vmatprep.subr.mxu0 0.0
        %1984 = vmatpush1.msra.mxu0 0.0
        %1985 = vmatprep.subr.mxu0 0.0
        %1986 = vmatpush1.msra.mxu0 0.0
        %1987 = vmatprep.subr.mxu0 0.0
        %1988 = vmatpush1.msra.mxu0 0.0
        %1989 = vmatprep.subr.mxu0 0.0
        %1990 = vmatpush1.msra.mxu0 0.0
        %1991 = vmatprep.subr.mxu0 0.0
        %1992 = vmatpush1.msra.mxu0 0.0
        %1993 = vmatprep.subr.mxu0 0.0
        %1994 = vmatpush1.msra.mxu0 0.0
        %1995 = vmatprep.subr.mxu0 0.0
        %1996 = vmatpush1.msra.mxu0 0.0
        %1997 = vmatprep.subr.mxu0 0.0
        %1998 = vmatpush1.msra.mxu0 0.0
        %1999 = vmatprep.subr.mxu0 0.0
        %2000 = vmatpush1.msra.mxu0 0.0
        %2001 = vmatprep.subr.mxu0 0.0
        %2002 = vmatpush1.msra.mxu0 0.0
        %2003 = vmatprep.subr.mxu0 0.0
        %2004 = vmatpush1.msra.mxu0 0.0
        %2005 = vmatprep.subr.mxu0 0.0
        %2006 = vmatpush1.msra.mxu0 0.0
        %2007 = vmatprep.subr.mxu0 0.0
        %2008 = vmatpush1.msra.mxu0 0.0
        %2009 = vmatprep.subr.mxu0 0.0
        %2010 = vmatpush1.msra.mxu0 0.0
        %2011 = vmatprep.subr.mxu0 0.0
        %2012 = vmatpush1.msra.mxu0 0.0
        %2013 = vmatprep.subr.mxu0 0.0
        %2014 = vmatpush1.msra.mxu0 0.0
        %2015 = vmatprep.subr.mxu0 0.0
        %2016 = vmatpush1.msra.mxu0 0.0
        %2017 = vmatprep.subr.mxu0 0.0
        %2018 = vmatpush1.msra.mxu0 0.0
        %2019 = vmatprep.mubr.f32.mxu0 0.0
        %2020 = vmatmul.mubr.f32.gmra.mrb[0].mxu0 %v1944
        %v2021 = vpop.f32.mrb[0].mxu0
        %v2022 = vadd.f32 0.0, %v2021
        %v2023 = vpop.f32.mrb[0].mxu0
        %v2024 = vadd.f32 0.0, %v2023
        %2025 = vmatprep.mubr.f32.mxu0 0.0
        %2026 = vmatmul.mubr.f32.gmra.mrb[0].mxu0 %v1947
        %v2027 = vpop.f32.mrb[0].mxu0
        %v2028 = vadd.f32 0.0, %v2027
        %v2029 = vpop.f32.mrb[0].mxu0
        %v2030 = vadd.f32 0.0, %v2029
        %2031 = vmatprep.mubr.f32.mxu0 0.0
        %2032 = vmatmul.mubr.f32.gmra.mrb[0].mxu0 %v1950
        %v2033 = vpop.f32.mrb[0].mxu0
        %v2034 = vadd.f32 0.0, %v2033
        %v2035 = vpop.f32.mrb[0].mxu0
        %v2036 = vadd.f32 0.0, %v2035
        %2037 = vmatprep.mubr.f32.mxu0 0.0
        %2038 = vmatmul.mubr.f32.gmra.mrb[0].mxu0 %v1953
        %v2039 = vpop.f32.mrb[0].mxu0
        %v2040 = vadd.f32 0.0, %v2039
        %v2041 = vpop.f32.mrb[0].mxu0
        %v2042 = vadd.f32 0.0, %v2041
        %2043 = vdwg.mxu0
        %v2044 = vsub.f32 %v1680, %v2022
        %v2045 = vsub.f32 %v1681, %v2024
        %v2046 = vsub.f32 %v1682, %v2028
        %v2047 = vsub.f32 %v1683, %v2030
        %v2048 = vsub.f32 %v1684, %v2034
        %v2049 = vsub.f32 %v1685, %v2036
        %v2050 = vsub.f32 %v1686, %v2040
        %v2051 = vsub.f32 %v1687, %v2042
        %v2052 = vmul.f32 %v2044, %v2044
        %v2053 = vmul.f32 %v2045, %v2045
        %v2054 = vmul.f32 %v2046, %v2046
        %v2055 = vmul.f32 %v2047, %v2047
        %v2056 = vmul.f32 %v2048, %v2048
        %v2057 = vmul.f32 %v2049, %v2049
        %v2058 = vmul.f32 %v2050, %v2050
        %v2059 = vmul.f32 %v2051, %v2051
        %2060 = vmatprep.subr.mxu0 %v2053
        %2061 = vmatpush1.msra.mxu0 %v2052
        %2062 = vmatprep.subr.mxu0 %v2055
        %2063 = vmatpush1.msra.mxu0 %v2054
        %2064 = vmatprep.subr.mxu0 %v2057
        %2065 = vmatpush1.msra.mxu0 %v2056
        %2066 = vmatprep.subr.mxu0 %v2059
        %2067 = vmatpush1.msra.mxu0 %v2058
        %2068 = vmatprep.subr.mxu0 0.0
        %2069 = vmatpush1.msra.mxu0 0.0
        %2070 = vmatprep.subr.mxu0 0.0
        %2071 = vmatpush1.msra.mxu0 0.0
        %2072 = vmatprep.subr.mxu0 0.0
        %2073 = vmatpush1.msra.mxu0 0.0
        %2074 = vmatprep.subr.mxu0 0.0
        %2075 = vmatpush1.msra.mxu0 0.0
        %2076 = vmatprep.subr.mxu0 0.0
        %2077 = vmatpush1.msra.mxu0 0.0
        %2078 = vmatprep.subr.mxu0 0.0
        %2079 = vmatpush1.msra.mxu0 0.0
        %2080 = vmatprep.subr.mxu0 0.0
        %2081 = vmatpush1.msra.mxu0 0.0
        %2082 = vmatprep.subr.mxu0 0.0
        %2083 = vmatpush1.msra.mxu0 0.0
        %2084 = vmatprep.subr.mxu0 0.0
        %2085 = vmatpush1.msra.mxu0 0.0
        %2086 = vmatprep.subr.mxu0 0.0
        %2087 = vmatpush1.msra.mxu0 0.0
        %2088 = vmatprep.subr.mxu0 0.0
        %2089 = vmatpush1.msra.mxu0 0.0
        %2090 = vmatprep.subr.mxu0 0.0
        %2091 = vmatpush1.msra.mxu0 0.0
        %2092 = vmatprep.subr.mxu0 0.0
        %2093 = vmatpush1.msra.mxu0 0.0
        %2094 = vmatprep.subr.mxu0 0.0
        %2095 = vmatpush1.msra.mxu0 0.0
        %2096 = vmatprep.subr.mxu0 0.0
        %2097 = vmatpush1.msra.mxu0 0.0
        %2098 = vmatprep.subr.mxu0 0.0
        %2099 = vmatpush1.msra.mxu0 0.0
        %2100 = vmatprep.subr.mxu0 0.0
        %2101 = vmatpush1.msra.mxu0 0.0
        %2102 = vmatprep.subr.mxu0 0.0
        %2103 = vmatpush1.msra.mxu0 0.0
        %2104 = vmatprep.subr.mxu0 0.0
        %2105 = vmatpush1.msra.mxu0 0.0
        %2106 = vmatprep.subr.mxu0 0.0
        %2107 = vmatpush1.msra.mxu0 0.0
        %2108 = vmatprep.subr.mxu0 0.0
        %2109 = vmatpush1.msra.mxu0 0.0
        %2110 = vmatprep.subr.mxu0 0.0
        %2111 = vmatpush1.msra.mxu0 0.0
        %2112 = vmatprep.subr.mxu0 0.0
        %2113 = vmatpush1.msra.mxu0 0.0
        %2114 = vmatprep.subr.mxu0 0.0
        %2115 = vmatpush1.msra.mxu0 0.0
        %2116 = vmatprep.subr.mxu0 0.0
        %2117 = vmatpush1.msra.mxu0 0.0
        %2118 = vmatprep.subr.mxu0 0.0
        %2119 = vmatpush1.msra.mxu0 0.0
        %2120 = vmatprep.subr.mxu0 0.0
        %2121 = vmatpush1.msra.mxu0 0.0
        %2122 = vmatprep.subr.mxu0 0.0
        %2123 = vmatpush1.msra.mxu0 0.0
        %2124 = vmatprep.mubr.f32.mxu0 0.0
        %2125 = vmatmul.mubr.f32.gmra.mrb[0].mxu0 %v1944
        %v2126 = vpop.f32.mrb[0].mxu0
        %v2127 = vadd.f32 1e-05, %v2126
        %v2128 = vpop.f32.mrb[0].mxu0
        %v2129 = vadd.f32 1e-05, %v2128
        %2130 = vmatprep.mubr.f32.mxu0 0.0
        %2131 = vmatmul.mubr.f32.gmra.mrb[0].mxu0 %v1947
        %v2132 = vpop.f32.mrb[0].mxu0
        %v2133 = vadd.f32 1e-05, %v2132
        %v2134 = vpop.f32.mrb[0].mxu0
        %v2135 = vadd.f32 1e-05, %v2134
        %2136 = vmatprep.mubr.f32.mxu0 0.0
        %2137 = vmatmul.mubr.f32.gmra.mrb[0].mxu0 %v1950
        %v2138 = vpop.f32.mrb[0].mxu0
        %v2139 = vadd.f32 1e-05, %v2138
        %v2140 = vpop.f32.mrb[0].mxu0
        %v2141 = vadd.f32 1e-05, %v2140
        %2142 = vmatprep.mubr.f32.mxu0 0.0
        %2143 = vmatmul.mubr.f32.gmra.mrb[0].mxu0 %v1953
        %v2144 = vpop.f32.mrb[0].mxu0
        %v2145 = vadd.f32 1e-05, %v2144
        %v2146 = vpop.f32.mrb[0].mxu0
        %v2147 = vadd.f32 1e-05, %v2146
        %2148 = vdwg.mxu0
        %v2149 = vrsqrt.pop %v2127
        %v2150 = vrsqrt.pop %v2129
        %v2151 = vrsqrt.pop %v2133
        %v2152 = vrsqrt.pop %v2135
        %v2153 = vrsqrt.pop %v2139
        %v2154 = vrsqrt.pop %v2141
        %v2155 = vrsqrt.pop %v2145
        %v2156 = vrsqrt.pop %v2147
        %v2157 = vmul.f32 %v2044, %v2149
        %v2158 = vmul.f32 %v2045, %v2150
        %v2159 = vmul.f32 %v2046, %v2151
        %v2160 = vmul.f32 %v2047, %v2152
        %v2161 = vmul.f32 %v2048, %v2153
        %v2162 = vmul.f32 %v2049, %v2154
        %v2163 = vmul.f32 %v2050, %v2155
        %v2164 = vmul.f32 %v2051, %v2156
        %2166 = vset.pattern.permute.xlu0 0
        %2167 = vperm.xlu0 %2166, %v646
        %v2168 = vpop.permute.xlu0 %2167
        %2171 = vset.pattern.permute.xlu0 0
        %2172 = vperm.xlu0 %2171, %v647
        %v2173 = vpop.permute.xlu0 %2172
        %2176 = vset.pattern.permute.xlu0 0
        %2177 = vperm.xlu0 %2176, %v648
        %v2178 = vpop.permute.xlu0 %2177
        %2181 = vset.pattern.permute.xlu0 0
        %2182 = vperm.xlu0 %2181, %v649
        %v2183 = vpop.permute.xlu0 %2182
        %v2185 = vmul.f32 %v2157, %v2168
        %v2186 = vmul.f32 %v2158, %v2168
        %v2187 = vmul.f32 %v2159, %v2173
        %v2188 = vmul.f32 %v2160, %v2173
        %v2189 = vmul.f32 %v2161, %v2178
        %v2190 = vmul.f32 %v2162, %v2178
        %v2191 = vmul.f32 %v2163, %v2183
        %v2192 = vmul.f32 %v2164, %v2183
        %2194 = vset.pattern.permute.xlu0 0
        %2195 = vperm.xlu0 %2194, %v650
        %v2196 = vpop.permute.xlu0 %2195
        %2199 = vset.pattern.permute.xlu0 0
        %2200 = vperm.xlu0 %2199, %v651
        %v2201 = vpop.permute.xlu0 %2200
        %2204 = vset.pattern.permute.xlu0 0
        %2205 = vperm.xlu0 %2204, %v652
        %v2206 = vpop.permute.xlu0 %2205
        %2209 = vset.pattern.permute.xlu0 0
        %2210 = vperm.xlu0 %2209, %v653
        %v2211 = vpop.permute.xlu0 %2210
        %v2213 = vadd.f32 %v2185, %v2196
        %v2214 = vadd.f32 %v2186, %v2196
        %v2215 = vadd.f32 %v2187, %v2201
        %v2216 = vadd.f32 %v2188, %v2201
        %v2217 = vadd.f32 %v2189, %v2206
        %v2218 = vadd.f32 %v2190, %v2206
        %v2219 = vadd.f32 %v2191, %v2211
        %v2220 = vadd.f32 %v2192, %v2211
        %v2221 = vmul.f32 %v1905, %v1905
        %v2222 = vmul.f32 %v1907, %v1907
        %v2223 = vmul.f32 %v1911, %v1911
        %v2224 = vmul.f32 %v1913, %v1913
        %v2225 = vmul.f32 %v1917, %v1917
        %v2226 = vmul.f32 %v1919, %v1919
        %v2227 = vmul.f32 %v1923, %v1923
        %v2228 = vmul.f32 %v1925, %v1925
        %v2229 = vadd.f32 %v2221, %v2225
        %v2230 = vadd.f32 %v2222, %v2226
        %v2231 = vadd.f32 %v2223, %v2227
        %v2232 = vadd.f32 %v2224, %v2228
        %v2233 = vmul.f32 %v1929, %v1929
        %v2234 = vmul.f32 %v1931, %v1931
        %v2235 = vmul.f32 %v1935, %v1935
        %v2236 = vmul.f32 %v1937, %v1937
        %v2237 = vadd.f32 %v2229, %v2233
        %v2238 = vadd.f32 %v2230, %v2234
        %v2239 = vadd.f32 %v2231, %v2235
        %v2240 = vadd.f32 %v2232, %v2236
        %v2241 = vld [vmem:[%s11] sm:$0xff]
        %v2242 = vld [vmem:[%s11 + $0x8] sm:$0xff]
        %vm2243 = vcmask 130048
        %v2245 = vsel %vm2243, %v2241, 0
        %v2248 = vsel %vm2243, %v2242, 0
        %2250 = vmatprep.subr.mxu0 %v2238
        %2251 = vmatpush1.msra.mxu0 %v2237
        %2252 = vmatprep.subr.mxu0 %v2240
        %2253 = vmatpush1.msra.mxu0 %v2239
        %2254 = vmatprep.subr.mxu0 0.0
        %2255 = vmatpush1.msra.mxu0 0.0
        %2256 = vmatprep.subr.mxu0 0.0
        %2257 = vmatpush1.msra.mxu0 0.0
        %2258 = vmatprep.subr.mxu0 0.0
        %2259 = vmatpush1.msra.mxu0 0.0
        %2260 = vmatprep.subr.mxu0 0.0
        %2261 = vmatpush1.msra.mxu0 0.0
        %2262 = vmatprep.subr.mxu0 0.0
        %2263 = vmatpush1.msra.mxu0 0.0
        %2264 = vmatprep.subr.mxu0 0.0
        %2265 = vmatpush1.msra.mxu0 0.0
        %2266 = vmatprep.subr.mxu0 0.0
        %2267 = vmatpush1.msra.mxu0 0.0
        %2268 = vmatprep.subr.mxu0 0.0
        %2269 = vmatpush1.msra.mxu0 0.0
        %2270 = vmatprep.subr.mxu0 0.0
        %2271 = vmatpush1.msra.mxu0 0.0
        %2272 = vmatprep.subr.mxu0 0.0
        %2273 = vmatpush1.msra.mxu0 0.0
        %2274 = vmatprep.subr.mxu0 0.0
        %2275 = vmatpush1.msra.mxu0 0.0
        %2276 = vmatprep.subr.mxu0 0.0
        %2277 = vmatpush1.msra.mxu0 0.0
        %2278 = vmatprep.subr.mxu0 0.0
        %2279 = vmatpush1.msra.mxu0 0.0
        %2280 = vmatprep.subr.mxu0 0.0
        %2281 = vmatpush1.msra.mxu0 0.0
        %2282 = vmatprep.subr.mxu0 0.0
        %2283 = vmatpush1.msra.mxu0 0.0
        %2284 = vmatprep.subr.mxu0 0.0
        %2285 = vmatpush1.msra.mxu0 0.0
        %2286 = vmatprep.subr.mxu0 0.0
        %2287 = vmatpush1.msra.mxu0 0.0
        %2288 = vmatprep.subr.mxu0 0.0
        %2289 = vmatpush1.msra.mxu0 0.0
        %2290 = vmatprep.subr.mxu0 0.0
        %2291 = vmatpush1.msra.mxu0 0.0
        %2292 = vmatprep.subr.mxu0 0.0
        %2293 = vmatpush1.msra.mxu0 0.0
        %2294 = vmatprep.subr.mxu0 0.0
        %2295 = vmatpush1.msra.mxu0 0.0
        %2296 = vmatprep.subr.mxu0 0.0
        %2297 = vmatpush1.msra.mxu0 0.0
        %2298 = vmatprep.subr.mxu0 0.0
        %2299 = vmatpush1.msra.mxu0 0.0
        %2300 = vmatprep.subr.mxu0 0.0
        %2301 = vmatpush1.msra.mxu0 0.0
        %2302 = vmatprep.subr.mxu0 0.0
        %2303 = vmatpush1.msra.mxu0 0.0
        %2304 = vmatprep.subr.mxu0 0.0
        %2305 = vmatpush1.msra.mxu0 0.0
        %2306 = vmatprep.subr.mxu0 0.0
        %2307 = vmatpush1.msra.mxu0 0.0
        %2308 = vmatprep.subr.mxu0 0.0
        %2309 = vmatpush1.msra.mxu0 0.0
        %2310 = vmatprep.subr.mxu0 0.0
        %2311 = vmatpush1.msra.mxu0 0.0
        %2312 = vmatprep.subr.mxu0 0.0
        %2313 = vmatpush1.msra.mxu0 0.0
        %2314 = vmatprep.mubr.f32.mxu0 0.0
        %2315 = vmatmul.mubr.f32.gmra.mrb[0].mxu0 %v2245
        %v2316 = vpop.f32.mrb[0].mxu0
        %v2317 = vadd.f32 1e-05, %v2316
        %v2318 = vpop.f32.mrb[0].mxu0
        %v2319 = vadd.f32 1e-05, %v2318
        %2320 = vmatprep.mubr.f32.mxu0 0.0
        %2321 = vmatmul.mubr.f32.gmra.mrb[0].mxu0 %v2248
        %v2322 = vpop.f32.mrb[0].mxu0
        %v2323 = vadd.f32 1e-05, %v2322
        %v2324 = vpop.f32.mrb[0].mxu0
        %v2325 = vadd.f32 1e-05, %v2324
        %2326 = vdwg.mxu0
        %v2327 = vrsqrt.pop %v2317
        %v2328 = vrsqrt.pop %v2319
        %v2329 = vrsqrt.pop %v2323
        %v2330 = vrsqrt.pop %v2325
        %2332 = vset.pattern.permute.xlu0 0
        %2333 = vperm.xlu0 %2332, %v654
        %v2334 = vpop.permute.xlu0 %2333
        %2337 = vset.pattern.permute.xlu0 0
        %2338 = vperm.xlu0 %2337, %v655
        %v2339 = vpop.permute.xlu0 %2338
        %v2341 = vmul.f32 %v2327, %v2334
        %v2342 = vmul.f32 %v2328, %v2334
        %v2343 = vmul.f32 %v2329, %v2339
        %v2344 = vmul.f32 %v2330, %v2339
        %v2345 = vadd.f32 %v607, %v2213
        %v2346 = vadd.f32 %v608, %v2214
        %v2347 = vadd.f32 %v609, %v2215
        %v2348 = vadd.f32 %v610, %v2216
        %v2349 = vadd.f32 %v611, %v2217
        %v2350 = vadd.f32 %v612, %v2218
        %v2351 = vadd.f32 %v613, %v2219
        %v2352 = vadd.f32 %v614, %v2220
        %v2353 = vpack.c.bf16 %v2347, %v2345
        %v2354 = vpack.c.bf16 %v2348, %v2346
        %v2355 = vpack.c.bf16 %v2351, %v2349
        %v2356 = vpack.c.bf16 %v2352, %v2350
        %v2361 = vunpack.c.l.b16 %v2353
        %v2362 = vunpack.c.l.b16 %v2354
        %v2363 = vunpack.c.h.b16 %v2353
        %v2364 = vunpack.c.h.b16 %v2354
        %v2365 = vunpack.c.l.b16 %v2355
        %v2366 = vunpack.c.l.b16 %v2356
        %v2367 = vunpack.c.h.b16 %v2355
        %v2368 = vunpack.c.h.b16 %v2356
        %v2369 = vpack.c.b16 %v2362, %v2361
        %v2370 = vpack.c.b16 %v2364, %v2363
        %v2371 = vpack.c.b16 %v2366, %v2365
        %v2372 = vpack.c.b16 %v2368, %v2367
        %2377 = vst [vmem:[%s591] sm:$0xff] %v2369
        %2378 = vst [vmem:[%s591 + $0x8] sm:$0xff] %v2370
        %2379 = vst [vmem:[%s591 + $0x10] sm:$0xff] %v2371
        %2380 = vst [vmem:[%s591 + $0x18] sm:$0xff] %v2372
        %v2381 = vmul.f32 %v1905, %v2341
        %v2382 = vmul.f32 %v1907, %v2342
        %v2383 = vmul.f32 %v1911, %v2343
        %v2384 = vmul.f32 %v1913, %v2344
        %v2385 = vadd.f32 %v621, %v2381
        %v2386 = vadd.f32 %v622, %v2382
        %v2387 = vadd.f32 %v623, %v2383
        %v2388 = vadd.f32 %v624, %v2384
        %v2389 = vpack.c.bf16 %v2387, %v2385
        %v2390 = vpack.c.bf16 %v2388, %v2386
        %v2393 = vunpack.c.l.b16 %v2389
        %v2394 = vunpack.c.l.b16 %v2390
        %v2395 = vunpack.c.h.b16 %v2389
        %v2396 = vunpack.c.h.b16 %v2390
        %v2397 = vpack.c.b16 %v2394, %v2393
        %v2398 = vpack.c.b16 %v2396, %v2395
        %2401 = vst [vmem:[%s598] sm:$0xff] %v2397
        %2402 = vst [vmem:[%s598 + $0x8] sm:$0xff] %v2398
        %v2403 = vmul.f32 %v1917, %v2341
        %v2404 = vmul.f32 %v1919, %v2342
        %v2405 = vmul.f32 %v1923, %v2343
        %v2406 = vmul.f32 %v1925, %v2344
        %v2407 = vadd.f32 %v625, %v2403
        %v2408 = vadd.f32 %v626, %v2404
        %v2409 = vadd.f32 %v627, %v2405
        %v2410 = vadd.f32 %v628, %v2406
        %v2411 = vpack.c.bf16 %v2409, %v2407
        %v2412 = vpack.c.bf16 %v2410, %v2408
        %v2415 = vunpack.c.l.b16 %v2411
        %v2416 = vunpack.c.l.b16 %v2412
        %v2417 = vunpack.c.h.b16 %v2411
        %v2418 = vunpack.c.h.b16 %v2412
        %v2419 = vpack.c.b16 %v2416, %v2415
        %v2420 = vpack.c.b16 %v2418, %v2417
        %2423 = vst [vmem:[%s598 + $0x10] sm:$0xff] %v2419
        %2424 = vst [vmem:[%s598 + $0x18] sm:$0xff] %v2420
        %v2425 = vmul.f32 %v1929, %v2341
        %v2426 = vmul.f32 %v1931, %v2342
        %v2427 = vmul.f32 %v1935, %v2343
        %v2428 = vmul.f32 %v1937, %v2344
        %v2429 = vadd.f32 %v629, %v2425
        %v2430 = vadd.f32 %v630, %v2426
        %v2431 = vadd.f32 %v631, %v2427
        %v2432 = vadd.f32 %v632, %v2428
        %v2433 = vpack.c.bf16 %v2431, %v2429
        %v2434 = vpack.c.bf16 %v2432, %v2430
        %v2437 = vunpack.c.l.b16 %v2433
        %v2438 = vunpack.c.l.b16 %v2434
        %v2439 = vunpack.c.h.b16 %v2433
        %v2440 = vunpack.c.h.b16 %v2434
        %v2441 = vpack.c.b16 %v2438, %v2437
        %v2442 = vpack.c.b16 %v2440, %v2439
        %2445 = vst [vmem:[%s598 + $0x20] sm:$0xff] %v2441
        %2446 = vst [vmem:[%s598 + $0x28] sm:$0xff] %v2442
        %s2447 = sand.u32 %s323, 1
        %s2448 = scalar_lea.sflag [#allocation5], %s2447
        %s2449 = sand.u32 %s323, 1
        %s2450 = smul.addr %s2449, 32
        %s2451 = scalar_lea.vmem [#allocation4], %s2450
        %s2452 = sand.u32 %s349, 1
        %s2453 = scalar_lea.sflag [#allocation7], %s2452
        %s2454 = sand.u32 %s349, 1
        %s2455 = smul.addr %s2454, 48
        %s2456 = scalar_lea.vmem [#allocation6], %s2455
        // Predicated region
        $region149: #{tpu_custom_call.1} parent=139 // pred_check
          %p2457 = pneg %p333
        $region150: #{tpu_custom_call.1} parent=139 // pred_check_branch
          %2459 = sbr.rel (%p2457) target = $region152
        $region151: #{tpu_custom_call.1} parent=139 // pred_region
          %s2460 = smul.u32 2, %s32
          %s2462 = ssub.s32 512, 512
          %2463 = vsyncadd %s2448, %s2462
          %s2464 = smul.addr %s2460, 64
          %s2465 = scalar_lea.hbm %s13, %s2464
          %s2466 = sshll.u32 %s2451, 4
          %s2467 = int_to_ptr.vmem [resolvable:$true] %s2466
          %2472 = dma.vmem_to_hbm [thread:$0]  %s2467, 512, %s2465, %s2448, 128, 256, 8
        $region152: #{tpu_custom_call.1} parent=139 // pred_fallthru
          _
        // Predicated region
        $region153: #{tpu_custom_call.1} parent=139 // pred_check
          %p2473 = pneg %p359
        $region154: #{tpu_custom_call.1} parent=139 // pred_check_branch
          %2475 = sbr.rel (%p2473) target = $region156
        $region155: #{tpu_custom_call.1} parent=139 // pred_region
          %s2476 = smul.u32 2, %s32
          %s2478 = ssub.s32 768, 768
          %2479 = vsyncadd %s2453, %s2478
          %s2480 = smul.addr %s2476, 64
          %s2481 = scalar_lea.hbm %s14, %s2480
          %s2482 = sshll.u32 %s2456, 4
          %s2483 = int_to_ptr.vmem [resolvable:$true] %s2482
          %2488 = dma.vmem_to_hbm [thread:$0]  %s2483, 768, %s2481, %s2453, 128, 256, 8
        $region156: #{tpu_custom_call.1} parent=139 // pred_fallthru
          _
      $region140: #{tpu_custom_call.1} parent=5 // pred_fallthru
        _
      %p2489 = scmp.le.s32.totalorder 2, %s27
      // Predicated region
      $region157: #{tpu_custom_call.1} parent=5 // pred_check
        %p2490 = pneg %p2489
      $region158: #{tpu_custom_call.1} parent=5 // pred_check_branch
        %2492 = sbr.rel (%p2490) target = $region160
      $region159: #{tpu_custom_call.1} parent=5 // pred_region
        %s2493 = ssub.s32 %s27, 2
        // Predicated region
        $region161: #{tpu_custom_call.1} parent=159 // pred_check
          %p2494 = pneg %p339
        $region162: #{tpu_custom_call.1} parent=159 // pred_check_branch
          %2496 = sbr.rel (%p2494) target = $region164
        $region163: #{tpu_custom_call.1} parent=159 // pred_region
          %s2497 = sand.u32 %s324, 1
          %s2498 = scalar_lea.sflag [#allocation5], %s2497
          %s2499 = sand.u32 %s324, 1
          %s2500 = smul.addr %s2499, 32
          %s2501 = scalar_lea.vmem [#allocation4], %s2500
          %2502 = dma.done %s2498, 512
        $region164: #{tpu_custom_call.1} parent=159 // pred_fallthru
          _
        // Predicated region
        $region165: #{tpu_custom_call.1} parent=159 // pred_check
          %p2503 = pneg %p365
        $region166: #{tpu_custom_call.1} parent=159 // pred_check_branch
          %2505 = sbr.rel (%p2503) target = $region168
        $region167: #{tpu_custom_call.1} parent=159 // pred_region
          %s2506 = sand.u32 %s350, 1
          %s2507 = scalar_lea.sflag [#allocation7], %s2506
          %s2508 = sand.u32 %s350, 1
          %s2509 = smul.addr %s2508, 48
          %s2510 = scalar_lea.vmem [#allocation6], %s2509
          %2511 = dma.done %s2507, 768
        $region168: #{tpu_custom_call.1} parent=159 // pred_fallthru
          _
      $region160: #{tpu_custom_call.1} parent=5 // pred_fallthru
        _
    $region6: #{tpu_custom_call.1} parent=1 // loop_footer
      %s31 = sadd.s32 1, %s27
    $region7: #{tpu_custom_call.1} parent=1 // loop_footer_branch
      %26 = sbr.rel target = $region3
    $region8: #{tpu_custom_call.1} parent=1 // loop_exit
      _
    %2512 = vsyncpa [#allocation5], 1
    %s2513 = scalar_lea.sflag [#allocation5], 1
    %2514 = vsyncpa %s2513, 1
    %2515 = vsyncpa [#allocation7], 1
    %s2516 = scalar_lea.sflag [#allocation7], 1
    %2517 = vsyncpa %s2516, 1

</llo_original>
